<compile_context>
chip_gen: v7x
topology: tpu7x:2x2x1
jax: 0.10.0
libtpu: 0.0.40
codegen_flags: <defaults>
</compile_context>

<pallas_src>
import functools
import numpy as np

import jax
import jax.numpy as jnp
from jax.experimental import pallas as pl
from jax.experimental.pallas import tpu as pltpu


# ------------------------------ bilinear matrices ------------------------------------

def make_bilinear_matrix(out_size: int, in_size: int) -> np.ndarray:
    """Interpolation matrix matching F.interpolate(mode='bilinear', align_corners=False)."""
    scale = in_size / out_size
    A = np.zeros((out_size, in_size), dtype=np.float32)
    for p in range(out_size):
        src = max((p + 0.5) * scale - 0.5, 0.0)
        i0 = min(int(np.floor(src)), in_size - 1)
        i1 = min(i0 + 1, in_size - 1)
        lam = src - i0
        A[p, i0] += 1.0 - lam
        A[p, i1] += lam
    return A


def make_upsample_matrix(H, W, Ho, Wo) -> np.ndarray:
    """Combined matrix U with U[h*W+w, p*Wo+q] = Ah[p,h]*Aw[q,w]."""
    Ah = make_bilinear_matrix(Ho, H).astype(np.float64)
    Aw = make_bilinear_matrix(Wo, W).astype(np.float64)
    U = np.einsum('ph,qw->hwpq', Ah, Aw).reshape(H * W, Ho * Wo)
    return U.astype(np.float32)


# ----------------------------------- kernel ------------------------------------------

def fpn_branch_kernel(x_ref, w1_ref, b1_ref, s1_ref, t1_ref, w2_ref, b2_ref, u_ref,
                      o_ref, ybuf, *, H, W):
    # x_ref:  (1, H*W + 2*(W+1), Cin)  flattened spatial, zero pre-padded (wrapper)
    # w1_ref: (9, Cin, Cmid)           conv1 taps (HWIO, taps flattened)
    # b1/s1/t1: (1, Cmid)              conv1 bias, folded-BN scale / shift
    # w2_ref: (9, Cout, Cmid)          conv2 taps, output-channel major (for A @ B^T)
    # b2_ref: (Cout, 1)
    # u_ref:  (H*W, Ho*Wo)             combined bilinear upsample matrix
    # o_ref:  (1, Cout, Ho*Wo)         lane-dense NCHW output (flattened spatial)
    # ybuf:   (H*W + 2*(W+1), Cmid)    scratch: zero-padded conv1 activations
    HW = H * W
    P = W + 1                       # flat zero-padding rows on each side
    Cmid = w1_ref.shape[2]
    Cout = w2_ref.shape[1]

    # Column-edge masks (row edges are handled by the flat zero padding).
    col = jax.lax.broadcasted_iota(jnp.int32, (HW, 1), 0) % W
    m_left = (col > 0).astype(jnp.float32)          # kills w-1 wrap-around (dw == -1)
    m_right = (col < (W - 1)).astype(jnp.float32)   # kills w+1 wrap-around (dw == +1)

    def shifted(load, dh, dw):
        patch = load(P + dh * W + dw)               # static sublane-offset slice
        if dw == -1:
            patch = patch * m_left
        elif dw == 1:
            patch = patch * m_right
        return patch

    # ---- conv1 (3x3, SAME): 9 shifted (HW, Cin) @ (Cin, Cmid) matmuls -----------
    acc1 = jnp.zeros((HW, Cmid), jnp.float32)
    for dh in (-1, 0, 1):
        for dw in (-1, 0, 1):
            k = (dh + 1) * 3 + (dw + 1)
            patch = shifted(lambda s: x_ref[0, s:s + HW, :], dh, dw)
            acc1 = acc1 + jnp.dot(patch, w1_ref[k],
                                  preferred_element_type=jnp.float32)

    # bias + folded BatchNorm + ReLU, applied once on the whole image
    y1 = jnp.maximum((acc1 + b1_ref[...]) * s1_ref[...] + t1_ref[...], 0.0)

    # Stage conv1 activations into a flat, zero-padded scratch for conv2's taps.
    ybuf[...] = jnp.zeros(ybuf.shape, ybuf.dtype)
    ybuf[P:P + HW, :] = y1

    # ---- conv2 (3x3, SAME), channel-major: 9 A @ B^T matmuls -> (Cout, HW) ------
    acc2 = jnp.zeros((Cout, HW), jnp.float32)
    for dh in (-1, 0, 1):
        for dw in (-1, 0, 1):
            k = (dh + 1) * 3 + (dw + 1)
            patch = shifted(lambda s: ybuf[s:s + HW, :], dh, dw)
            acc2 = acc2 + jax.lax.dot_general(
                w2_ref[k], patch,
                dimension_numbers=(((1,), (1,)), ((), ())),
                preferred_element_type=jnp.float32)
    feat = acc2 + b2_ref[...]                        # (Cout, HW), conv2 bias included

    # ---- fused bilinear upsample, lane-dense NCHW store ------------------------
    o_ref[0] = jnp.dot(feat, u_ref[...],
                       preferred_element_type=jnp.float32).astype(o_ref.dtype)


# ---------------------------------- wrappers ------------------------------------------

def fpn_branch(x_nchw, p, scale_factor):
    N, Cin, H, W = x_nchw.shape
    Cmid = p["w1"].shape[-1]
    Cout = p["w2"].shape[-1]
    HW, P = H * W, W + 1
    Ho, Wo = H * scale_factor, W * scale_factor
    eps = 1e-5

    # NCHW -> spatial-major flat (N, H*W, Cin), zero padded by P rows on both sides.
    x_flat = jnp.transpose(x_nchw, (0, 2, 3, 1)).reshape(N, HW, Cin)
    x_flat = jnp.pad(x_flat, ((0, 0), (P, P), (0, 0)))

    w1 = p["w1"].reshape(9, Cin, Cmid)                                  # (tap, Cin, Cmid)
    w2t = jnp.transpose(p["w2"], (0, 1, 3, 2)).reshape(9, Cout, Cmid)   # (tap, Cout, Cmid)

    inv_std = 1.0 / jnp.sqrt(p["rvar"] + eps)
    s1 = (p["gamma"] * inv_std).reshape(1, Cmid)
    t1 = (p["beta"] - p["rmean"] * p["gamma"] * inv_std).reshape(1, Cmid)
    b1 = p["b1"].reshape(1, Cmid)
    b2 = p["b2"].reshape(Cout, 1)
    U = jnp.asarray(make_upsample_matrix(H, W, Ho, Wo))

    kernel = functools.partial(fpn_branch_kernel, H=H, W=W)
    out = pl.pallas_call(
        kernel,
        out_shape=jax.ShapeDtypeStruct((N, Cout, Ho * Wo), jnp.float32),
        grid=(N,),
        in_specs=[
            pl.BlockSpec((1, HW + 2 * P, Cin), lambda n: (n, 0, 0)),
            pl.BlockSpec((9, Cin, Cmid), lambda n: (0, 0, 0)),
            pl.BlockSpec((1, Cmid), lambda n: (0, 0)),
            pl.BlockSpec((1, Cmid), lambda n: (0, 0)),
            pl.BlockSpec((1, Cmid), lambda n: (0, 0)),
            pl.BlockSpec((9, Cout, Cmid), lambda n: (0, 0, 0)),
            pl.BlockSpec((Cout, 1), lambda n: (0, 0)),
            pl.BlockSpec((HW, Ho * Wo), lambda n: (0, 0)),
        ],
        out_specs=pl.BlockSpec((1, Cout, Ho * Wo), lambda n: (n, 0, 0)),
        scratch_shapes=[pltpu.VMEM((HW + 2 * P, Cmid), jnp.float32)],
        compiler_params=pltpu.CompilerParams(dimension_semantics=("parallel",)),
    )(x_flat, w1, b1, s1, t1, w2t, b2, U)

    # Already channel-major: just un-flatten the spatial dim -> NCHW.
    return out.reshape(N, Cout, Ho, Wo)


def fpn_forward(xs_nchw, last_layer_nchw, params_list):
    n_levels = len(params_list)
    hcs = []
    for i, (x, p) in enumerate(zip(xs_nchw, params_list)):
        sf = 2 ** (n_levels - i)
        hcs.append(fpn_branch(x, p, sf))
    hcs.append(last_layer_nchw)
    return jnp.concatenate(hcs, axis=1)


# ------------------------ plain-JAX reference (for checking) ------------------------

def fpn_branch_ref(x_nhwc, p, sf):
    eps = 1e-5
    dn = ('NHWC', 'HWIO', 'NHWC')
    y = jax.lax.conv_general_dilated(x_nhwc, p["w1"], (1, 1), 'SAME',
                                     dimension_numbers=dn,
                                     precision=jax.lax.Precision.HIGHEST) + p["b1"]
    y = (y - p["rmean"]) / jnp.sqrt(p["rvar"] + eps) * p["gamma"] + p["beta"]
    y = jnp.maximum(y, 0.0)
    y = jax.lax.conv_general_dilated(y, p["w2"], (1, 1), 'SAME',
                                     dimension_numbers=dn,
                                     precision=jax.lax.Precision.HIGHEST) + p["b2"]
    H, W = x_nhwc.shape[1:3]
    Ah = jnp.asarray(make_bilinear_matrix(H * sf, H))
    Aw = jnp.asarray(make_bilinear_matrix(W * sf, W))
    return jnp.einsum('ph,qw,nhwc->npqc', Ah, Aw, y,
                      precision=jax.lax.Precision.HIGHEST)


def fpn_forward_ref(xs_nchw, last_layer_nchw, params_list):
    n_levels = len(params_list)
    hcs = []
    for i, (x, p) in enumerate(zip(xs_nchw, params_list)):
        sf = 2 ** (n_levels - i)
        out_nhwc = fpn_branch_ref(jnp.transpose(x, (0, 2, 3, 1)), p, sf)
        hcs.append(jnp.transpose(out_nhwc, (0, 3, 1, 2)))
    hcs.append(last_layer_nchw)
    return jnp.concatenate(hcs, axis=1)


# ------------------------------- parameter init -------------------------------------

def init_branch_params(key, in_ch, out_ch):
    cmid = out_ch * 2
    k = jax.random.split(key, 8)
    return dict(
        w1=0.1 * jax.random.normal(k[0], (3, 3, in_ch, cmid), jnp.float32),
        b1=0.1 * jax.random.normal(k[1], (cmid,), jnp.float32),
        gamma=1.0 + 0.1 * jax.random.normal(k[2], (cmid,), jnp.float32),
        beta=0.1 * jax.random.normal(k[3], (cmid,), jnp.float32),
        rmean=0.1 * jax.random.normal(k[4], (cmid,), jnp.float32),
        rvar=jax.random.uniform(k[5], (cmid,), jnp.float32, 0.5, 1.5),
        w2=0.1 * jax.random.normal(k[6], (3, 3, cmid, out_ch), jnp.float32),
        b2=0.1 * jax.random.normal(k[7], (out_ch,), jnp.float32),
    )


if __name__ == "__main__":
    key = jax.random.PRNGKey(0)
    input_channels = [8, 4]
    output_channels = [4, 2]

    kx0, kx1, kl, kp0, kp1 = jax.random.split(key, 5)
    # xs[i] is upsampled by 2**(2-i): level 0 is 4x4 -> 16x16, level 1 is 8x8 -> 16x16
    xs = [jax.random.normal(kx0, (2, 8, 4, 4), jnp.float32),
          jax.random.normal(kx1, (2, 4, 8, 8), jnp.float32)]
    last_layer = jax.random.normal(kl, (2, 3, 16, 16), jnp.float32)
    params = [init_branch_params(kp0, 8, 4), init_branch_params(kp1, 4, 2)]

    out = jax.block_until_ready(fpn_forward(xs, last_layer, params))
    ref = jax.block_until_ready(fpn_forward_ref(xs, last_layer, params))

    assert out.shape == (2, sum(output_channels) + 3, 16, 16), out.shape
    # tolerance allows for MXU f32 multi-pass rounding; a real bug (e.g. a missing
    # bias, ~0.07 abs) would still fail this check.
    np.testing.assert_allclose(np.asarray(out), np.asarray(ref), rtol=1e-2, atol=1e-2)
    print("KERNEL_OK")
</pallas_src>

<mosaic_0001>
module attributes {stable_mosaic.version = 11 : i64} {
  func.func @fpn_branch_kernel(%arg0: i32, %arg1: memref<1x26x8xf32, #tpu.memory_space<vmem>>, %arg2: memref<9x8x8xf32, #tpu.memory_space<vmem>>, %arg3: memref<1x8xf32, #tpu.memory_space<vmem>>, %arg4: memref<1x8xf32, #tpu.memory_space<vmem>>, %arg5: memref<1x8xf32, #tpu.memory_space<vmem>>, %arg6: memref<9x4x8xf32, #tpu.memory_space<vmem>>, %arg7: memref<4x1xf32, #tpu.memory_space<vmem>>, %arg8: memref<16x256xf32, #tpu.memory_space<vmem>>, %arg9: memref<1x4x256xf32, #tpu.memory_space<vmem>>, %arg10: memref<26x8xf32, #tpu.memory_space<vmem>>) attributes {dimension_semantics = [#tpu.dimension_semantics<parallel>], iteration_bounds = array<i64: 2>, scalar_prefetch = 0 : i64, scratch_operands = 1 : i64, tpu.core_type = #tpu.core_type<tc>, window_params = [{transform_indices = @transform_0, window_bounds = array<i64: 1, 26, 8>}, {pipeline_mode = #tpu.pipeline_mode<synchronous>, transform_indices = @transform_1, window_bounds = array<i64: 9, 8, 8>}, {pipeline_mode = #tpu.pipeline_mode<synchronous>, transform_indices = @transform_2, window_bounds = array<i64: 1, 8>}, {pipeline_mode = #tpu.pipeline_mode<synchronous>, transform_indices = @transform_3, window_bounds = array<i64: 1, 8>}, {pipeline_mode = #tpu.pipeline_mode<synchronous>, transform_indices = @transform_4, window_bounds = array<i64: 1, 8>}, {pipeline_mode = #tpu.pipeline_mode<synchronous>, transform_indices = @transform_5, window_bounds = array<i64: 9, 4, 8>}, {pipeline_mode = #tpu.pipeline_mode<synchronous>, transform_indices = @transform_6, window_bounds = array<i64: 4, 1>}, {pipeline_mode = #tpu.pipeline_mode<synchronous>, transform_indices = @transform_7, window_bounds = array<i64: 16, 256>}, {transform_indices = @transform_8, window_bounds = array<i64: 1, 4, 256>}]} {
    %0 = tpu.iota {dimensions = array<i32: 0>} : vector<16x1xi32>
    %c4_i32 = arith.constant 4 : i32
    %c0_i32 = arith.constant 0 : i32
    %1 = arith.cmpi eq, %c4_i32, %c0_i32 : i32
    %c1_i32 = arith.constant 1 : i32
    %2 = arith.select %1, %c1_i32, %c4_i32 : i32
    %3 = vector.broadcast %2 : i32 to vector<16x1xi32>
    %4 = arith.remsi %0, %3 : vector<16x1xi32>
    %c0_i32_0 = arith.constant 0 : i32
    %5 = vector.broadcast %c0_i32_0 : i32 to vector<16x1xi32>
    %6 = arith.cmpi ne, %4, %5 : vector<16x1xi32>
    %c0_i32_1 = arith.constant 0 : i32
    %7 = vector.broadcast %c0_i32_1 : i32 to vector<16x1xi32>
    %8 = arith.cmpi slt, %4, %7 : vector<16x1xi32>
    %c0_i32_2 = arith.constant 0 : i32
    %9 = arith.cmpi slt, %2, %c0_i32_2 : i32
    %10 = vector.broadcast %9 : i1 to vector<16x1xi1>
    %11 = vector.broadcast %10 : vector<16x1xi1> to vector<16x1xi1>
    %12 = arith.xori %8, %11 : vector<16x1xi1>
    %13 = arith.andi %12, %6 : vector<16x1xi1>
    %14 = vector.broadcast %2 : i32 to vector<16x1xi32>
    %15 = arith.addi %4, %14 : vector<16x1xi32>
    %16 = arith.select %13, %15, %4 : vector<16x1xi1>, vector<16x1xi32>
    %c0_i32_3 = arith.constant 0 : i32
    %17 = vector.broadcast %c0_i32_3 : i32 to vector<16x1xi32>
    %18 = arith.cmpi sgt, %16, %17 : vector<16x1xi32>
    %19 = arith.extui %18 : vector<16x1xi1> to vector<16x1xi32>
    %20 = arith.sitofp %19 : vector<16x1xi32> to vector<16x1xf32>
    %c3_i32 = arith.constant 3 : i32
    %21 = vector.broadcast %c3_i32 : i32 to vector<16x1xi32>
    %22 = arith.cmpi slt, %16, %21 : vector<16x1xi32>
    %23 = arith.extui %22 : vector<16x1xi1> to vector<16x1xi32>
    %24 = arith.sitofp %23 : vector<16x1xi32> to vector<16x1xf32>
    %cst = arith.constant 0.000000e+00 : f32
    %25 = vector.broadcast %cst : f32 to vector<16x8xf32>
    %c0 = arith.constant 0 : index
    %c0_4 = arith.constant 0 : index
    %c0_5 = arith.constant 0 : index
    %26 = vector.load %arg1[%c0, %c0_4, %c0_5] : memref<1x26x8xf32, #tpu.memory_space<vmem>>, vector<1x16x8xf32>
    %27 = vector.shape_cast %26 : vector<1x16x8xf32> to vector<16x8xf32>
    %28 = vector.broadcast %20 : vector<16x1xf32> to vector<16x8xf32>
    %29 = arith.mulf %27, %28 : vector<16x8xf32>
    %c0_6 = arith.constant 0 : index
    %c0_7 = arith.constant 0 : index
    %c0_8 = arith.constant 0 : index
    %30 = vector.load %arg2[%c0_6, %c0_7, %c0_8] : memref<9x8x8xf32, #tpu.memory_space<vmem>>, vector<1x8x8xf32>
    %31 = vector.shape_cast %30 : vector<1x8x8xf32> to vector<8x8xf32>
    %cst_9 = arith.constant dense<0.000000e+00> : vector<16x8xf32>
    %32 = tpu.matmul %29, %31, %cst_9 {dimension_numbers = #tpu.dot_dimension_numbers<[1], [0], [0], [1], [0, 0, 1, 1], [], []>} : vector<16x8xf32>, vector<8x8xf32>, vector<16x8xf32> -> vector<16x8xf32>
    %33 = arith.addf %25, %32 : vector<16x8xf32>
    %c0_10 = arith.constant 0 : index
    %c1 = arith.constant 1 : index
    %c0_11 = arith.constant 0 : index
    %34 = vector.load %arg1[%c0_10, %c1, %c0_11] : memref<1x26x8xf32, #tpu.memory_space<vmem>>, vector<1x16x8xf32>
    %35 = vector.shape_cast %34 : vector<1x16x8xf32> to vector<16x8xf32>
    %c1_12 = arith.constant 1 : index
    %c0_13 = arith.constant 0 : index
    %c0_14 = arith.constant 0 : index
    %36 = vector.load %arg2[%c1_12, %c0_13, %c0_14] : memref<9x8x8xf32, #tpu.memory_space<vmem>>, vector<1x8x8xf32>
    %37 = vector.shape_cast %36 : vector<1x8x8xf32> to vector<8x8xf32>
    %cst_15 = arith.constant dense<0.000000e+00> : vector<16x8xf32>
    %38 = tpu.matmul %35, %37, %cst_15 {dimension_numbers = #tpu.dot_dimension_numbers<[1], [0], [0], [1], [0, 0, 1, 1], [], []>} : vector<16x8xf32>, vector<8x8xf32>, vector<16x8xf32> -> vector<16x8xf32>
    %39 = arith.addf %33, %38 : vector<16x8xf32>
    %c0_16 = arith.constant 0 : index
    %c2 = arith.constant 2 : index
    %c0_17 = arith.constant 0 : index
    %40 = vector.load %arg1[%c0_16, %c2, %c0_17] : memref<1x26x8xf32, #tpu.memory_space<vmem>>, vector<1x16x8xf32>
    %41 = vector.shape_cast %40 : vector<1x16x8xf32> to vector<16x8xf32>
    %42 = vector.broadcast %24 : vector<16x1xf32> to vector<16x8xf32>
    %43 = arith.mulf %41, %42 : vector<16x8xf32>
    %c2_18 = arith.constant 2 : index
    %c0_19 = arith.constant 0 : index
    %c0_20 = arith.constant 0 : index
    %44 = vector.load %arg2[%c2_18, %c0_19, %c0_20] : memref<9x8x8xf32, #tpu.memory_space<vmem>>, vector<1x8x8xf32>
    %45 = vector.shape_cast %44 : vector<1x8x8xf32> to vector<8x8xf32>
    %cst_21 = arith.constant dense<0.000000e+00> : vector<16x8xf32>
    %46 = tpu.matmul %43, %45, %cst_21 {dimension_numbers = #tpu.dot_dimension_numbers<[1], [0], [0], [1], [0, 0, 1, 1], [], []>} : vector<16x8xf32>, vector<8x8xf32>, vector<16x8xf32> -> vector<16x8xf32>
    %47 = arith.addf %39, %46 : vector<16x8xf32>
    %c0_22 = arith.constant 0 : index
    %c4 = arith.constant 4 : index
    %c0_23 = arith.constant 0 : index
    %48 = vector.load %arg1[%c0_22, %c4, %c0_23] : memref<1x26x8xf32, #tpu.memory_space<vmem>>, vector<1x16x8xf32>
    %49 = vector.shape_cast %48 : vector<1x16x8xf32> to vector<16x8xf32>
    %50 = vector.broadcast %20 : vector<16x1xf32> to vector<16x8xf32>
    %51 = arith.mulf %49, %50 : vector<16x8xf32>
    %c3 = arith.constant 3 : index
    %c0_24 = arith.constant 0 : index
    %c0_25 = arith.constant 0 : index
    %52 = vector.load %arg2[%c3, %c0_24, %c0_25] : memref<9x8x8xf32, #tpu.memory_space<vmem>>, vector<1x8x8xf32>
    %53 = vector.shape_cast %52 : vector<1x8x8xf32> to vector<8x8xf32>
    %cst_26 = arith.constant dense<0.000000e+00> : vector<16x8xf32>
    %54 = tpu.matmul %51, %53, %cst_26 {dimension_numbers = #tpu.dot_dimension_numbers<[1], [0], [0], [1], [0, 0, 1, 1], [], []>} : vector<16x8xf32>, vector<8x8xf32>, vector<16x8xf32> -> vector<16x8xf32>
    %55 = arith.addf %47, %54 : vector<16x8xf32>
    %c0_27 = arith.constant 0 : index
    %c5 = arith.constant 5 : index
    %c0_28 = arith.constant 0 : index
    %56 = vector.load %arg1[%c0_27, %c5, %c0_28] : memref<1x26x8xf32, #tpu.memory_space<vmem>>, vector<1x16x8xf32>
    %57 = vector.shape_cast %56 : vector<1x16x8xf32> to vector<16x8xf32>
    %c4_29 = arith.constant 4 : index
    %c0_30 = arith.constant 0 : index
    %c0_31 = arith.constant 0 : index
    %58 = vector.load %arg2[%c4_29, %c0_30, %c0_31] : memref<9x8x8xf32, #tpu.memory_space<vmem>>, vector<1x8x8xf32>
    %59 = vector.shape_cast %58 : vector<1x8x8xf32> to vector<8x8xf32>
    %cst_32 = arith.constant dense<0.000000e+00> : vector<16x8xf32>
    %60 = tpu.matmul %57, %59, %cst_32 {dimension_numbers = #tpu.dot_dimension_numbers<[1], [0], [0], [1], [0, 0, 1, 1], [], []>} : vector<16x8xf32>, vector<8x8xf32>, vector<16x8xf32> -> vector<16x8xf32>
    %61 = arith.addf %55, %60 : vector<16x8xf32>
    %c0_33 = arith.constant 0 : index
    %c6 = arith.constant 6 : index
    %c0_34 = arith.constant 0 : index
    %62 = vector.load %arg1[%c0_33, %c6, %c0_34] : memref<1x26x8xf32, #tpu.memory_space<vmem>>, vector<1x16x8xf32>
    %63 = vector.shape_cast %62 : vector<1x16x8xf32> to vector<16x8xf32>
    %64 = vector.broadcast %24 : vector<16x1xf32> to vector<16x8xf32>
    %65 = arith.mulf %63, %64 : vector<16x8xf32>
    %c5_35 = arith.constant 5 : index
    %c0_36 = arith.constant 0 : index
    %c0_37 = arith.constant 0 : index
    %66 = vector.load %arg2[%c5_35, %c0_36, %c0_37] : memref<9x8x8xf32, #tpu.memory_space<vmem>>, vector<1x8x8xf32>
    %67 = vector.shape_cast %66 : vector<1x8x8xf32> to vector<8x8xf32>
    %cst_38 = arith.constant dense<0.000000e+00> : vector<16x8xf32>
    %68 = tpu.matmul %65, %67, %cst_38 {dimension_numbers = #tpu.dot_dimension_numbers<[1], [0], [0], [1], [0, 0, 1, 1], [], []>} : vector<16x8xf32>, vector<8x8xf32>, vector<16x8xf32> -> vector<16x8xf32>
    %69 = arith.addf %61, %68 : vector<16x8xf32>
    %c0_39 = arith.constant 0 : index
    %c8 = arith.constant 8 : index
    %c0_40 = arith.constant 0 : index
    %70 = vector.load %arg1[%c0_39, %c8, %c0_40] : memref<1x26x8xf32, #tpu.memory_space<vmem>>, vector<1x16x8xf32>
    %71 = vector.shape_cast %70 : vector<1x16x8xf32> to vector<16x8xf32>
    %72 = vector.broadcast %20 : vector<16x1xf32> to vector<16x8xf32>
    %73 = arith.mulf %71, %72 : vector<16x8xf32>
    %c6_41 = arith.constant 6 : index
    %c0_42 = arith.constant 0 : index
    %c0_43 = arith.constant 0 : index
    %74 = vector.load %arg2[%c6_41, %c0_42, %c0_43] : memref<9x8x8xf32, #tpu.memory_space<vmem>>, vector<1x8x8xf32>
    %75 = vector.shape_cast %74 : vector<1x8x8xf32> to vector<8x8xf32>
    %cst_44 = arith.constant dense<0.000000e+00> : vector<16x8xf32>
    %76 = tpu.matmul %73, %75, %cst_44 {dimension_numbers = #tpu.dot_dimension_numbers<[1], [0], [0], [1], [0, 0, 1, 1], [], []>} : vector<16x8xf32>, vector<8x8xf32>, vector<16x8xf32> -> vector<16x8xf32>
    %77 = arith.addf %69, %76 : vector<16x8xf32>
    %c0_45 = arith.constant 0 : index
    %c9 = arith.constant 9 : index
    %c0_46 = arith.constant 0 : index
    %78 = vector.load %arg1[%c0_45, %c9, %c0_46] : memref<1x26x8xf32, #tpu.memory_space<vmem>>, vector<1x16x8xf32>
    %79 = vector.shape_cast %78 : vector<1x16x8xf32> to vector<16x8xf32>
    %c7 = arith.constant 7 : index
    %c0_47 = arith.constant 0 : index
    %c0_48 = arith.constant 0 : index
    %80 = vector.load %arg2[%c7, %c0_47, %c0_48] : memref<9x8x8xf32, #tpu.memory_space<vmem>>, vector<1x8x8xf32>
    %81 = vector.shape_cast %80 : vector<1x8x8xf32> to vector<8x8xf32>
    %cst_49 = arith.constant dense<0.000000e+00> : vector<16x8xf32>
    %82 = tpu.matmul %79, %81, %cst_49 {dimension_numbers = #tpu.dot_dimension_numbers<[1], [0], [0], [1], [0, 0, 1, 1], [], []>} : vector<16x8xf32>, vector<8x8xf32>, vector<16x8xf32> -> vector<16x8xf32>
    %83 = arith.addf %77, %82 : vector<16x8xf32>
    %c0_50 = arith.constant 0 : index
    %c10 = arith.constant 10 : index
    %c0_51 = arith.constant 0 : index
    %84 = vector.load %arg1[%c0_50, %c10, %c0_51] : memref<1x26x8xf32, #tpu.memory_space<vmem>>, vector<1x16x8xf32>
    %85 = vector.shape_cast %84 : vector<1x16x8xf32> to vector<16x8xf32>
    %86 = vector.broadcast %24 : vector<16x1xf32> to vector<16x8xf32>
    %87 = arith.mulf %85, %86 : vector<16x8xf32>
    %c8_52 = arith.constant 8 : index
    %c0_53 = arith.constant 0 : index
    %c0_54 = arith.constant 0 : index
    %88 = vector.load %arg2[%c8_52, %c0_53, %c0_54] : memref<9x8x8xf32, #tpu.memory_space<vmem>>, vector<1x8x8xf32>
    %89 = vector.shape_cast %88 : vector<1x8x8xf32> to vector<8x8xf32>
    %cst_55 = arith.constant dense<0.000000e+00> : vector<16x8xf32>
    %90 = tpu.matmul %87, %89, %cst_55 {dimension_numbers = #tpu.dot_dimension_numbers<[1], [0], [0], [1], [0, 0, 1, 1], [], []>} : vector<16x8xf32>, vector<8x8xf32>, vector<16x8xf32> -> vector<16x8xf32>
    %91 = arith.addf %83, %90 : vector<16x8xf32>
    %c0_56 = arith.constant 0 : index
    %c0_57 = arith.constant 0 : index
    %92 = vector.load %arg3[%c0_56, %c0_57] : memref<1x8xf32, #tpu.memory_space<vmem>>, vector<1x8xf32>
    %93 = vector.broadcast %92 : vector<1x8xf32> to vector<16x8xf32>
    %94 = arith.addf %91, %93 : vector<16x8xf32>
    %c0_58 = arith.constant 0 : index
    %c0_59 = arith.constant 0 : index
    %95 = vector.load %arg4[%c0_58, %c0_59] : memref<1x8xf32, #tpu.memory_space<vmem>>, vector<1x8xf32>
    %96 = vector.broadcast %95 : vector<1x8xf32> to vector<16x8xf32>
    %97 = arith.mulf %94, %96 : vector<16x8xf32>
    %c0_60 = arith.constant 0 : index
    %c0_61 = arith.constant 0 : index
    %98 = vector.load %arg5[%c0_60, %c0_61] : memref<1x8xf32, #tpu.memory_space<vmem>>, vector<1x8xf32>
    %99 = vector.broadcast %98 : vector<1x8xf32> to vector<16x8xf32>
    %100 = arith.addf %97, %99 : vector<16x8xf32>
    %cst_62 = arith.constant 0.000000e+00 : f32
    %101 = vector.broadcast %cst_62 : f32 to vector<16x8xf32>
    %102 = arith.maximumf %100, %101 : vector<16x8xf32>
    %cst_63 = arith.constant 0.000000e+00 : f32
    %103 = vector.broadcast %cst_63 : f32 to vector<26x8xf32>
    %c0_64 = arith.constant 0 : index
    %c0_65 = arith.constant 0 : index
    %104 = vector.load %arg10[%c0_64, %c0_65] : memref<26x8xf32, #tpu.memory_space<vmem>>, vector<26x8xf32>
    tpu.vector_store %arg10[%c0_64, %c0_65], %103 {strides = array<i32>} : memref<26x8xf32, #tpu.memory_space<vmem>>, vector<26x8xf32>,
    %c5_66 = arith.constant 5 : index
    %c0_67 = arith.constant 0 : index
    %105 = vector.load %arg10[%c5_66, %c0_67] : memref<26x8xf32, #tpu.memory_space<vmem>>, vector<16x8xf32>
    tpu.vector_store %arg10[%c5_66, %c0_67], %102 {strides = array<i32>} : memref<26x8xf32, #tpu.memory_space<vmem>>, vector<16x8xf32>,
    %cst_68 = arith.constant 0.000000e+00 : f32
    %106 = vector.broadcast %cst_68 : f32 to vector<4x16xf32>
    %c0_69 = arith.constant 0 : index
    %c0_70 = arith.constant 0 : index
    %107 = vector.load %arg10[%c0_69, %c0_70] : memref<26x8xf32, #tpu.memory_space<vmem>>, vector<16x8xf32>
    %108 = vector.broadcast %20 : vector<16x1xf32> to vector<16x8xf32>
    %109 = arith.mulf %107, %108 : vector<16x8xf32>
    %c0_71 = arith.constant 0 : index
    %c0_72 = arith.constant 0 : index
    %c0_73 = arith.constant 0 : index
    %110 = vector.load %arg6[%c0_71, %c0_72, %c0_73] : memref<9x4x8xf32, #tpu.memory_space<vmem>>, vector<1x4x8xf32>
    %111 = vector.shape_cast %110 : vector<1x4x8xf32> to vector<4x8xf32>
    %cst_74 = arith.constant dense<0.000000e+00> : vector<4x16xf32>
    %112 = tpu.matmul %111, %109, %cst_74 {dimension_numbers = #tpu.dot_dimension_numbers<[1], [1], [0], [0], [0, 0, 1, 0], [], []>} : vector<4x8xf32>, vector<16x8xf32>, vector<4x16xf32> -> vector<4x16xf32>
    %113 = arith.addf %106, %112 : vector<4x16xf32>
    %c1_75 = arith.constant 1 : index
    %c0_76 = arith.constant 0 : index
    %114 = vector.load %arg10[%c1_75, %c0_76] : memref<26x8xf32, #tpu.memory_space<vmem>>, vector<16x8xf32>
    %c1_77 = arith.constant 1 : index
    %c0_78 = arith.constant 0 : index
    %c0_79 = arith.constant 0 : index
    %115 = vector.load %arg6[%c1_77, %c0_78, %c0_79] : memref<9x4x8xf32, #tpu.memory_space<vmem>>, vector<1x4x8xf32>
    %116 = vector.shape_cast %115 : vector<1x4x8xf32> to vector<4x8xf32>
    %cst_80 = arith.constant dense<0.000000e+00> : vector<4x16xf32>
    %117 = tpu.matmul %116, %114, %cst_80 {dimension_numbers = #tpu.dot_dimension_numbers<[1], [1], [0], [0], [0, 0, 1, 0], [], []>} : vector<4x8xf32>, vector<16x8xf32>, vector<4x16xf32> -> vector<4x16xf32>
    %118 = arith.addf %113, %117 : vector<4x16xf32>
    %c2_81 = arith.constant 2 : index
    %c0_82 = arith.constant 0 : index
    %119 = vector.load %arg10[%c2_81, %c0_82] : memref<26x8xf32, #tpu.memory_space<vmem>>, vector<16x8xf32>
    %120 = vector.broadcast %24 : vector<16x1xf32> to vector<16x8xf32>
    %121 = arith.mulf %119, %120 : vector<16x8xf32>
    %c2_83 = arith.constant 2 : index
    %c0_84 = arith.constant 0 : index
    %c0_85 = arith.constant 0 : index
    %122 = vector.load %arg6[%c2_83, %c0_84, %c0_85] : memref<9x4x8xf32, #tpu.memory_space<vmem>>, vector<1x4x8xf32>
    %123 = vector.shape_cast %122 : vector<1x4x8xf32> to vector<4x8xf32>
    %cst_86 = arith.constant dense<0.000000e+00> : vector<4x16xf32>
    %124 = tpu.matmul %123, %121, %cst_86 {dimension_numbers = #tpu.dot_dimension_numbers<[1], [1], [0], [0], [0, 0, 1, 0], [], []>} : vector<4x8xf32>, vector<16x8xf32>, vector<4x16xf32> -> vector<4x16xf32>
    %125 = arith.addf %118, %124 : vector<4x16xf32>
    %c4_87 = arith.constant 4 : index
    %c0_88 = arith.constant 0 : index
    %126 = vector.load %arg10[%c4_87, %c0_88] : memref<26x8xf32, #tpu.memory_space<vmem>>, vector<16x8xf32>
    %127 = vector.broadcast %20 : vector<16x1xf32> to vector<16x8xf32>
    %128 = arith.mulf %126, %127 : vector<16x8xf32>
    %c3_89 = arith.constant 3 : index
    %c0_90 = arith.constant 0 : index
    %c0_91 = arith.constant 0 : index
    %129 = vector.load %arg6[%c3_89, %c0_90, %c0_91] : memref<9x4x8xf32, #tpu.memory_space<vmem>>, vector<1x4x8xf32>
    %130 = vector.shape_cast %129 : vector<1x4x8xf32> to vector<4x8xf32>
    %cst_92 = arith.constant dense<0.000000e+00> : vector<4x16xf32>
    %131 = tpu.matmul %130, %128, %cst_92 {dimension_numbers = #tpu.dot_dimension_numbers<[1], [1], [0], [0], [0, 0, 1, 0], [], []>} : vector<4x8xf32>, vector<16x8xf32>, vector<4x16xf32> -> vector<4x16xf32>
    %132 = arith.addf %125, %131 : vector<4x16xf32>
    %c5_93 = arith.constant 5 : index
    %c0_94 = arith.constant 0 : index
    %133 = vector.load %arg10[%c5_93, %c0_94] : memref<26x8xf32, #tpu.memory_space<vmem>>, vector<16x8xf32>
    %c4_95 = arith.constant 4 : index
    %c0_96 = arith.constant 0 : index
    %c0_97 = arith.constant 0 : index
    %134 = vector.load %arg6[%c4_95, %c0_96, %c0_97] : memref<9x4x8xf32, #tpu.memory_space<vmem>>, vector<1x4x8xf32>
    %135 = vector.shape_cast %134 : vector<1x4x8xf32> to vector<4x8xf32>
    %cst_98 = arith.constant dense<0.000000e+00> : vector<4x16xf32>
    %136 = tpu.matmul %135, %133, %cst_98 {dimension_numbers = #tpu.dot_dimension_numbers<[1], [1], [0], [0], [0, 0, 1, 0], [], []>} : vector<4x8xf32>, vector<16x8xf32>, vector<4x16xf32> -> vector<4x16xf32>
    %137 = arith.addf %132, %136 : vector<4x16xf32>
    %c6_99 = arith.constant 6 : index
    %c0_100 = arith.constant 0 : index
    %138 = vector.load %arg10[%c6_99, %c0_100] : memref<26x8xf32, #tpu.memory_space<vmem>>, vector<16x8xf32>
    %139 = vector.broadcast %24 : vector<16x1xf32> to vector<16x8xf32>
    %140 = arith.mulf %138, %139 : vector<16x8xf32>
    %c5_101 = arith.constant 5 : index
    %c0_102 = arith.constant 0 : index
    %c0_103 = arith.constant 0 : index
    %141 = vector.load %arg6[%c5_101, %c0_102, %c0_103] : memref<9x4x8xf32, #tpu.memory_space<vmem>>, vector<1x4x8xf32>
    %142 = vector.shape_cast %141 : vector<1x4x8xf32> to vector<4x8xf32>
    %cst_104 = arith.constant dense<0.000000e+00> : vector<4x16xf32>
    %143 = tpu.matmul %142, %140, %cst_104 {dimension_numbers = #tpu.dot_dimension_numbers<[1], [1], [0], [0], [0, 0, 1, 0], [], []>} : vector<4x8xf32>, vector<16x8xf32>, vector<4x16xf32> -> vector<4x16xf32>
    %144 = arith.addf %137, %143 : vector<4x16xf32>
    %c8_105 = arith.constant 8 : index
    %c0_106 = arith.constant 0 : index
    %145 = vector.load %arg10[%c8_105, %c0_106] : memref<26x8xf32, #tpu.memory_space<vmem>>, vector<16x8xf32>
    %146 = vector.broadcast %20 : vector<16x1xf32> to vector<16x8xf32>
    %147 = arith.mulf %145, %146 : vector<16x8xf32>
    %c6_107 = arith.constant 6 : index
    %c0_108 = arith.constant 0 : index
    %c0_109 = arith.constant 0 : index
    %148 = vector.load %arg6[%c6_107, %c0_108, %c0_109] : memref<9x4x8xf32, #tpu.memory_space<vmem>>, vector<1x4x8xf32>
    %149 = vector.shape_cast %148 : vector<1x4x8xf32> to vector<4x8xf32>
    %cst_110 = arith.constant dense<0.000000e+00> : vector<4x16xf32>
    %150 = tpu.matmul %149, %147, %cst_110 {dimension_numbers = #tpu.dot_dimension_numbers<[1], [1], [0], [0], [0, 0, 1, 0], [], []>} : vector<4x8xf32>, vector<16x8xf32>, vector<4x16xf32> -> vector<4x16xf32>
    %151 = arith.addf %144, %150 : vector<4x16xf32>
    %c9_111 = arith.constant 9 : index
    %c0_112 = arith.constant 0 : index
    %152 = vector.load %arg10[%c9_111, %c0_112] : memref<26x8xf32, #tpu.memory_space<vmem>>, vector<16x8xf32>
    %c7_113 = arith.constant 7 : index
    %c0_114 = arith.constant 0 : index
    %c0_115 = arith.constant 0 : index
    %153 = vector.load %arg6[%c7_113, %c0_114, %c0_115] : memref<9x4x8xf32, #tpu.memory_space<vmem>>, vector<1x4x8xf32>
    %154 = vector.shape_cast %153 : vector<1x4x8xf32> to vector<4x8xf32>
    %cst_116 = arith.constant dense<0.000000e+00> : vector<4x16xf32>
    %155 = tpu.matmul %154, %152, %cst_116 {dimension_numbers = #tpu.dot_dimension_numbers<[1], [1], [0], [0], [0, 0, 1, 0], [], []>} : vector<4x8xf32>, vector<16x8xf32>, vector<4x16xf32> -> vector<4x16xf32>
    %156 = arith.addf %151, %155 : vector<4x16xf32>
    %c10_117 = arith.constant 10 : index
    %c0_118 = arith.constant 0 : index
    %157 = vector.load %arg10[%c10_117, %c0_118] : memref<26x8xf32, #tpu.memory_space<vmem>>, vector<16x8xf32>
    %158 = vector.broadcast %24 : vector<16x1xf32> to vector<16x8xf32>
    %159 = arith.mulf %157, %158 : vector<16x8xf32>
    %c8_119 = arith.constant 8 : index
    %c0_120 = arith.constant 0 : index
    %c0_121 = arith.constant 0 : index
    %160 = vector.load %arg6[%c8_119, %c0_120, %c0_121] : memref<9x4x8xf32, #tpu.memory_space<vmem>>, vector<1x4x8xf32>
    %161 = vector.shape_cast %160 : vector<1x4x8xf32> to vector<4x8xf32>
    %cst_122 = arith.constant dense<0.000000e+00> : vector<4x16xf32>
    %162 = tpu.matmul %161, %159, %cst_122 {dimension_numbers = #tpu.dot_dimension_numbers<[1], [1], [0], [0], [0, 0, 1, 0], [], []>} : vector<4x8xf32>, vector<16x8xf32>, vector<4x16xf32> -> vector<4x16xf32>
    %163 = arith.addf %156, %162 : vector<4x16xf32>
    %c0_123 = arith.constant 0 : index
    %c0_124 = arith.constant 0 : index
    %164 = vector.load %arg7[%c0_123, %c0_124] : memref<4x1xf32, #tpu.memory_space<vmem>>, vector<4x1xf32>
    %165 = vector.broadcast %164 : vector<4x1xf32> to vector<4x16xf32>
    %166 = arith.addf %163, %165 : vector<4x16xf32>
    %c0_125 = arith.constant 0 : index
    %c0_126 = arith.constant 0 : index
    %167 = vector.load %arg8[%c0_125, %c0_126] : memref<16x256xf32, #tpu.memory_space<vmem>>, vector<16x256xf32>
    %cst_127 = arith.constant dense<0.000000e+00> : vector<4x256xf32>
    %168 = tpu.matmul %166, %167, %cst_127 {dimension_numbers = #tpu.dot_dimension_numbers<[1], [0], [0], [1], [0, 0, 1, 1], [], []>} : vector<4x16xf32>, vector<16x256xf32>, vector<4x256xf32> -> vector<4x256xf32>
    %c0_128 = arith.constant 0 : index
    %c0_129 = arith.constant 0 : index
    %c0_130 = arith.constant 0 : index
    %169 = vector.load %arg9[%c0_128, %c0_129, %c0_130] : memref<1x4x256xf32, #tpu.memory_space<vmem>>, vector<1x4x256xf32>
    %170 = vector.shape_cast %169 : vector<1x4x256xf32> to vector<4x256xf32>
    %171 = vector.shape_cast %168 : vector<4x256xf32> to vector<1x4x256xf32>
    tpu.vector_store %arg9[%c0_128, %c0_129, %c0_130], %171 {strides = array<i32>} : memref<1x4x256xf32, #tpu.memory_space<vmem>>, vector<1x4x256xf32>,
    return
  }
  func.func @transform_0(%arg0: i32) -> (i32, i32, i32) {
    %c0_i32 = arith.constant 0 : i32
    %c0_i32_0 = arith.constant 0 : i32
    %c0_i32_1 = arith.constant 0 : i32
    return %arg0, %c0_i32, %c0_i32_0 : i32, i32, i32
  }
  func.func @transform_1(%arg0: i32) -> (i32, i32, i32) {
    %c0_i32 = arith.constant 0 : i32
    %c0_i32_0 = arith.constant 0 : i32
    %c0_i32_1 = arith.constant 0 : i32
    %c0_i32_2 = arith.constant 0 : i32
    return %c0_i32, %c0_i32_0, %c0_i32_1 : i32, i32, i32
  }
  func.func @transform_2(%arg0: i32) -> (i32, i32) {
    %c0_i32 = arith.constant 0 : i32
    %c0_i32_0 = arith.constant 0 : i32
    %c0_i32_1 = arith.constant 0 : i32
    return %c0_i32, %c0_i32_0 : i32, i32
  }
  func.func @transform_3(%arg0: i32) -> (i32, i32) {
    %c0_i32 = arith.constant 0 : i32
    %c0_i32_0 = arith.constant 0 : i32
    %c0_i32_1 = arith.constant 0 : i32
    return %c0_i32, %c0_i32_0 : i32, i32
  }
  func.func @transform_4(%arg0: i32) -> (i32, i32) {
    %c0_i32 = arith.constant 0 : i32
    %c0_i32_0 = arith.constant 0 : i32
    %c0_i32_1 = arith.constant 0 : i32
    return %c0_i32, %c0_i32_0 : i32, i32
  }
  func.func @transform_5(%arg0: i32) -> (i32, i32, i32) {
    %c0_i32 = arith.constant 0 : i32
    %c0_i32_0 = arith.constant 0 : i32
    %c0_i32_1 = arith.constant 0 : i32
    %c0_i32_2 = arith.constant 0 : i32
    return %c0_i32, %c0_i32_0, %c0_i32_1 : i32, i32, i32
  }
  func.func @transform_6(%arg0: i32) -> (i32, i32) {
    %c0_i32 = arith.constant 0 : i32
    %c0_i32_0 = arith.constant 0 : i32
    %c0_i32_1 = arith.constant 0 : i32
    return %c0_i32, %c0_i32_0 : i32, i32
  }
  func.func @transform_7(%arg0: i32) -> (i32, i32) {
    %c0_i32 = arith.constant 0 : i32
    %c0_i32_0 = arith.constant 0 : i32
    %c0_i32_1 = arith.constant 0 : i32
    return %c0_i32, %c0_i32_0 : i32, i32
  }
  func.func @transform_8(%arg0: i32) -> (i32, i32, i32) {
    %c0_i32 = arith.constant 0 : i32
    %c0_i32_0 = arith.constant 0 : i32
    %c0_i32_1 = arith.constant 0 : i32
    return %arg0, %c0_i32, %c0_i32_0 : i32, i32, i32
  }
}

</mosaic_0001>

<llo_original>
// kernel: tpu_custom_call.1
$region0: #{tpu_custom_call.1}
  #allocation0 [shape = 'u32[]', space=smem, size = 0x4, offset = 0x4, fixed_abs, tag = 'smem constant byte address 0x4 - core index']
  #allocation1 [shape = 'u32[144,128]{1,0:T(1,128)}', space=vmem, size = 0x12000, scoped, tag = 'internal scratch']
  #allocation2 [shape = 'f32[26,8]{1,0:T(8,128)}', space=vmem, size = 0x4000, scoped, tag = 'scratch operand']
  %s0 = inlined_call_operand.vmem [shape: f32[2,26,8], index: 0, kind: input, shape index: {}]
  %s1 = inlined_call_operand.vmem [shape: f32[9,8,8], index: 1, kind: input, shape index: {}]
  %s2 = inlined_call_operand.vmem [shape: f32[1,8], index: 2, kind: input, shape index: {}]
  %s3 = inlined_call_operand.vmem [shape: f32[1,8], index: 3, kind: input, shape index: {}]
  %s4 = inlined_call_operand.vmem [shape: f32[1,8], index: 4, kind: input, shape index: {}]
  %s5 = inlined_call_operand.vmem [shape: f32[9,4,8], index: 5, kind: input, shape index: {}]
  %s6 = inlined_call_operand.vmem [shape: f32[4,1], index: 6, kind: input, shape index: {}]
  %s7 = inlined_call_operand.vmem [shape: f32[16,256], index: 7, kind: input, shape index: {}]
  %s8 = inlined_call_operand.hbm [shape: f32[2,4,256], index: 8, kind: output, shape index: {}]
  %s9 = sld [smem:[#allocation0]]
  $region65: #{tpu_custom_call.1} parent=0
    _
  %s11 = ssub.s32 1, %s9
  %s12 = scalar_select 0, %s11, %s9
  $region1: #{tpu_custom_call.1} parent=0
    #allocation3 [shape = 'u8[8192]{0}', space=vmem, size = 0x2000, scoped, tag = 'output window, operand 0']
    #allocation4 [shape = 's32[2]{0}', space=sflag, size = 0x8, scoped, tag = 'scoped memory for tpu_custom_call.1']
    %13 = vsyncpa [#allocation4], 0
    %s14 = scalar_lea.sflag [#allocation4], 1
    %15 = vsyncpa %s14, 0
    loop: start=0, step=1, limit=4
    $region2: #{tpu_custom_call.1} parent=1 // loop_pre_header
      _
    $region3: #{tpu_custom_call.1} parent=1 // loop_header
      %s17 = sphi 0, %s21
      %p18 = scmp.ge.s32.totalorder %s17, 4
      %s27 = sphi 0, %s29
      %s30 = sphi 0, %s27
      %s31 = sphi 0, %s30
      %s47 = sphi 0, %s31
      %s51 = sphi 0, %s51
      %s53 = sphi 0, %s51
      %s54 = sphi 0, %s53
      %s68 = sphi 0, %s54
      %s72 = sphi 0, %s72
      %s74 = sphi 0, %s72
      %s75 = sphi 0, %s74
      %s89 = sphi 0, %s75
      %s93 = sphi 0, %s93
      %s95 = sphi 0, %s93
      %s96 = sphi 0, %s95
      %s110 = sphi 0, %s96
      %s114 = sphi 0, %s114
      %s116 = sphi 0, %s114
      %s117 = sphi 0, %s116
      %s131 = sphi 0, %s117
      %s135 = sphi 0, %s135
      %s137 = sphi 0, %s135
      %s138 = sphi 0, %s137
      %s152 = sphi 0, %s138
      %s156 = sphi 0, %s156
      %s158 = sphi 0, %s156
      %s159 = sphi 0, %s158
      %s173 = sphi 0, %s159
      %s177 = sphi 0, %s177
      %s179 = sphi 0, %s177
      %s180 = sphi 0, %s179
      %s194 = sphi 0, %s180
      %s200 = sphi 0, %s202
      %s203 = sphi 0, %s200
      %s204 = sphi 0, %s203
      %s220 = sphi 0, %s204
    $region4: #{tpu_custom_call.1} parent=1 // loop_header_branch
      %20 = sbr.rel (%p18) target = $region8
    $region5: #{tpu_custom_call.1} parent=1 // loop_body
      %s22 = ssub.s32 %s17, 1
      %s23 = ssub.s32 %s17, 2
      %s24 = sadd.s32 %s17, 1
      %s25 = ssub.s32 %s17, %s24
      %p26 = scmp.eq.s32.totalorder %s25, 0
      %s28 = sadd.s32 %s27, 1
      %s29 = scalar_select %p26, %s27, %s28
      %p32 = pneg %p26
      %p33 = scmp.eq.s32.totalorder %s17, 1
      %p34 = por %p32, %p33
      %p35 = scmp.ne.s32.totalorder %s27, %s30
      %p36 = scmp.eq.s32.totalorder %s17, 0
      %p37 = por %p35, %p36
      %p38 = scmp.ne.s32.totalorder %s27, %s30
      %p39 = scmp.eq.s32.totalorder %s22, 1
      %p40 = por %p38, %p39
      %p41 = scmp.ne.s32.totalorder %s30, %s31
      %p42 = scmp.eq.s32.totalorder %s22, 0
      %p43 = por %p41, %p42
      %p44 = scmp.ne.s32.totalorder %s30, %s31
      %p45 = scmp.eq.s32.totalorder %s23, 1
      %p46 = por %p44, %p45
      %p48 = scmp.ne.s32.totalorder %s31, %s47
      %p49 = scmp.eq.s32.totalorder %s23, 0
      %p50 = por %p48, %p49
      %s52 = sadd.s32 %s51, 1
      %p55 = scmp.eq.s32.totalorder %s17, 1
      %p56 = scmp.ne.s32.totalorder %s51, %s53
      %p57 = scmp.eq.s32.totalorder %s17, 0
      %p58 = por %p56, %p57
      %p59 = scmp.ne.s32.totalorder %s51, %s53
      %p60 = scmp.eq.s32.totalorder %s22, 1
      %p61 = por %p59, %p60
      %p62 = scmp.ne.s32.totalorder %s53, %s54
      %p63 = scmp.eq.s32.totalorder %s22, 0
      %p64 = por %p62, %p63
      %p65 = scmp.ne.s32.totalorder %s53, %s54
      %p66 = scmp.eq.s32.totalorder %s23, 1
      %p67 = por %p65, %p66
      %p69 = scmp.ne.s32.totalorder %s54, %s68
      %p70 = scmp.eq.s32.totalorder %s23, 0
      %p71 = por %p69, %p70
      %s73 = sadd.s32 %s72, 1
      %p76 = scmp.eq.s32.totalorder %s17, 1
      %p77 = scmp.ne.s32.totalorder %s72, %s74
      %p78 = scmp.eq.s32.totalorder %s17, 0
      %p79 = por %p77, %p78
      %p80 = scmp.ne.s32.totalorder %s72, %s74
      %p81 = scmp.eq.s32.totalorder %s22, 1
      %p82 = por %p80, %p81
      %p83 = scmp.ne.s32.totalorder %s74, %s75
      %p84 = scmp.eq.s32.totalorder %s22, 0
      %p85 = por %p83, %p84
      %p86 = scmp.ne.s32.totalorder %s74, %s75
      %p87 = scmp.eq.s32.totalorder %s23, 1
      %p88 = por %p86, %p87
      %p90 = scmp.ne.s32.totalorder %s75, %s89
      %p91 = scmp.eq.s32.totalorder %s23, 0
      %p92 = por %p90, %p91
      %s94 = sadd.s32 %s93, 1
      %p97 = scmp.eq.s32.totalorder %s17, 1
      %p98 = scmp.ne.s32.totalorder %s93, %s95
      %p99 = scmp.eq.s32.totalorder %s17, 0
      %p100 = por %p98, %p99
      %p101 = scmp.ne.s32.totalorder %s93, %s95
      %p102 = scmp.eq.s32.totalorder %s22, 1
      %p103 = por %p101, %p102
      %p104 = scmp.ne.s32.totalorder %s95, %s96
      %p105 = scmp.eq.s32.totalorder %s22, 0
      %p106 = por %p104, %p105
      %p107 = scmp.ne.s32.totalorder %s95, %s96
      %p108 = scmp.eq.s32.totalorder %s23, 1
      %p109 = por %p107, %p108
      %p111 = scmp.ne.s32.totalorder %s96, %s110
      %p112 = scmp.eq.s32.totalorder %s23, 0
      %p113 = por %p111, %p112
      %s115 = sadd.s32 %s114, 1
      %p118 = scmp.eq.s32.totalorder %s17, 1
      %p119 = scmp.ne.s32.totalorder %s114, %s116
      %p120 = scmp.eq.s32.totalorder %s17, 0
      %p121 = por %p119, %p120
      %p122 = scmp.ne.s32.totalorder %s114, %s116
      %p123 = scmp.eq.s32.totalorder %s22, 1
      %p124 = por %p122, %p123
      %p125 = scmp.ne.s32.totalorder %s116, %s117
      %p126 = scmp.eq.s32.totalorder %s22, 0
      %p127 = por %p125, %p126
      %p128 = scmp.ne.s32.totalorder %s116, %s117
      %p129 = scmp.eq.s32.totalorder %s23, 1
      %p130 = por %p128, %p129
      %p132 = scmp.ne.s32.totalorder %s117, %s131
      %p133 = scmp.eq.s32.totalorder %s23, 0
      %p134 = por %p132, %p133
      %s136 = sadd.s32 %s135, 1
      %p139 = scmp.eq.s32.totalorder %s17, 1
      %p140 = scmp.ne.s32.totalorder %s135, %s137
      %p141 = scmp.eq.s32.totalorder %s17, 0
      %p142 = por %p140, %p141
      %p143 = scmp.ne.s32.totalorder %s135, %s137
      %p144 = scmp.eq.s32.totalorder %s22, 1
      %p145 = por %p143, %p144
      %p146 = scmp.ne.s32.totalorder %s137, %s138
      %p147 = scmp.eq.s32.totalorder %s22, 0
      %p148 = por %p146, %p147
      %p149 = scmp.ne.s32.totalorder %s137, %s138
      %p150 = scmp.eq.s32.totalorder %s23, 1
      %p151 = por %p149, %p150
      %p153 = scmp.ne.s32.totalorder %s138, %s152
      %p154 = scmp.eq.s32.totalorder %s23, 0
      %p155 = por %p153, %p154
      %s157 = sadd.s32 %s156, 1
      %p160 = scmp.eq.s32.totalorder %s17, 1
      %p161 = scmp.ne.s32.totalorder %s156, %s158
      %p162 = scmp.eq.s32.totalorder %s17, 0
      %p163 = por %p161, %p162
      %p164 = scmp.ne.s32.totalorder %s156, %s158
      %p165 = scmp.eq.s32.totalorder %s22, 1
      %p166 = por %p164, %p165
      %p167 = scmp.ne.s32.totalorder %s158, %s159
      %p168 = scmp.eq.s32.totalorder %s22, 0
      %p169 = por %p167, %p168
      %p170 = scmp.ne.s32.totalorder %s158, %s159
      %p171 = scmp.eq.s32.totalorder %s23, 1
      %p172 = por %p170, %p171
      %p174 = scmp.ne.s32.totalorder %s159, %s173
      %p175 = scmp.eq.s32.totalorder %s23, 0
      %p176 = por %p174, %p175
      %s178 = sadd.s32 %s177, 1
      %p181 = scmp.eq.s32.totalorder %s17, 1
      %p182 = scmp.ne.s32.totalorder %s177, %s179
      %p183 = scmp.eq.s32.totalorder %s17, 0
      %p184 = por %p182, %p183
      %p185 = scmp.ne.s32.totalorder %s177, %s179
      %p186 = scmp.eq.s32.totalorder %s22, 1
      %p187 = por %p185, %p186
      %p188 = scmp.ne.s32.totalorder %s179, %s180
      %p189 = scmp.eq.s32.totalorder %s22, 0
      %p190 = por %p188, %p189
      %p191 = scmp.ne.s32.totalorder %s179, %s180
      %p192 = scmp.eq.s32.totalorder %s23, 1
      %p193 = por %p191, %p192
      %p195 = scmp.ne.s32.totalorder %s180, %s194
      %p196 = scmp.eq.s32.totalorder %s23, 0
      %p197 = por %p195, %p196
      %s198 = ssub.s32 %s17, %s24
      %p199 = scmp.eq.s32.totalorder %s198, 0
      %s201 = sadd.s32 %s200, 1
      %s202 = scalar_select %p199, %s200, %s201
      %p205 = pneg %p199
      %p206 = scmp.eq.s32.totalorder %s17, 1
      %p207 = por %p205, %p206
      %p208 = scmp.ne.s32.totalorder %s200, %s203
      %p209 = scmp.eq.s32.totalorder %s17, 0
      %p210 = por %p208, %p209
      %p211 = scmp.ne.s32.totalorder %s200, %s203
      %p212 = scmp.eq.s32.totalorder %s22, 1
      %p213 = por %p211, %p212
      %p214 = scmp.ne.s32.totalorder %s203, %s204
      %p215 = scmp.eq.s32.totalorder %s22, 0
      %p216 = por %p214, %p215
      %p217 = scmp.ne.s32.totalorder %s203, %s204
      %p218 = scmp.eq.s32.totalorder %s23, 1
      %p219 = por %p217, %p218
      %p221 = scmp.ne.s32.totalorder %s204, %s220
      %p222 = scmp.eq.s32.totalorder %s23, 0
      %p223 = por %p221, %p222
      %p224 = scmp.le.s32.totalorder 1, %s17
      %p225 = scmp.lt.s32.totalorder %s17, 3
      %p226 = pnand %p224, %p225
      %p227 = pneg %p226
      // Predicated region
      $region9: #{tpu_custom_call.1} parent=5 // pred_check
        _
      $region10: #{tpu_custom_call.1} parent=5 // pred_check_branch
        %229 = sbr.rel (%p226) target = $region12
      $region11: #{tpu_custom_call.1} parent=5 // pred_region
        %s230 = ssub.s32 %s17, 1
        // Predicated region
        $region13: #{tpu_custom_call.1} parent=11 // pred_check
          %p231 = pneg %p64
        $region14: #{tpu_custom_call.1} parent=11 // pred_check_branch
          %233 = sbr.rel (%p231) target = $region16
        $region15: #{tpu_custom_call.1} parent=11 // pred_region
          _
        $region16: #{tpu_custom_call.1} parent=11 // pred_fallthru
          _
        // Predicated region
        $region17: #{tpu_custom_call.1} parent=11 // pred_check
          %p234 = pneg %p85
        $region18: #{tpu_custom_call.1} parent=11 // pred_check_branch
          %236 = sbr.rel (%p234) target = $region20
        $region19: #{tpu_custom_call.1} parent=11 // pred_region
          _
        $region20: #{tpu_custom_call.1} parent=11 // pred_fallthru
          _
        // Predicated region
        $region21: #{tpu_custom_call.1} parent=11 // pred_check
          %p237 = pneg %p106
        $region22: #{tpu_custom_call.1} parent=11 // pred_check_branch
          %239 = sbr.rel (%p237) target = $region24
        $region23: #{tpu_custom_call.1} parent=11 // pred_region
          _
        $region24: #{tpu_custom_call.1} parent=11 // pred_fallthru
          _
        // Predicated region
        $region25: #{tpu_custom_call.1} parent=11 // pred_check
          %p240 = pneg %p127
        $region26: #{tpu_custom_call.1} parent=11 // pred_check_branch
          %242 = sbr.rel (%p240) target = $region28
        $region27: #{tpu_custom_call.1} parent=11 // pred_region
          _
        $region28: #{tpu_custom_call.1} parent=11 // pred_fallthru
          _
        // Predicated region
        $region29: #{tpu_custom_call.1} parent=11 // pred_check
          %p243 = pneg %p148
        $region30: #{tpu_custom_call.1} parent=11 // pred_check_branch
          %245 = sbr.rel (%p243) target = $region32
        $region31: #{tpu_custom_call.1} parent=11 // pred_region
          _
        $region32: #{tpu_custom_call.1} parent=11 // pred_fallthru
          _
        // Predicated region
        $region33: #{tpu_custom_call.1} parent=11 // pred_check
          %p246 = pneg %p169
        $region34: #{tpu_custom_call.1} parent=11 // pred_check_branch
          %248 = sbr.rel (%p246) target = $region36
        $region35: #{tpu_custom_call.1} parent=11 // pred_region
          _
        $region36: #{tpu_custom_call.1} parent=11 // pred_fallthru
          _
        // Predicated region
        $region37: #{tpu_custom_call.1} parent=11 // pred_check
          %p249 = pneg %p190
        $region38: #{tpu_custom_call.1} parent=11 // pred_check_branch
          %251 = sbr.rel (%p249) target = $region40
        $region39: #{tpu_custom_call.1} parent=11 // pred_region
          _
        $region40: #{tpu_custom_call.1} parent=11 // pred_fallthru
          _
      $region12: #{tpu_custom_call.1} parent=5 // pred_fallthru
        _
      %p252 = scmp.lt.s32.totalorder %s17, 2
      // Predicated region
      $region41: #{tpu_custom_call.1} parent=5 // pred_check
        %p253 = pneg %p252
      $region42: #{tpu_custom_call.1} parent=5 // pred_check_branch
        %255 = sbr.rel (%p253) target = $region44
      $region43: #{tpu_custom_call.1} parent=5 // pred_region
        // Predicated region
        $region45: #{tpu_custom_call.1} parent=43 // pred_check
          %p256 = pneg %p37
        $region46: #{tpu_custom_call.1} parent=43 // pred_check_branch
          %258 = sbr.rel (%p256) target = $region48
        $region47: #{tpu_custom_call.1} parent=43 // pred_region
          %p259 = scmp.lt.s32.totalorder %s17, 1
          %s260 = scalar_select %p259, %s17, 1
          %s261 = smul.addr %s260, 4
          %s262 = smul.addr %s261, 8
          %s263 = scalar_lea.vmem %s0, %s262
        $region48: #{tpu_custom_call.1} parent=43 // pred_fallthru
          _
      $region44: #{tpu_custom_call.1} parent=5 // pred_fallthru
        _
      %p264 = scmp.le.s32.totalorder 1, %s17
      %p265 = scmp.lt.s32.totalorder %s17, 3
      %p266 = pnand %p264, %p265
      %p267 = pneg %p266
      // Predicated region
      $region49: #{tpu_custom_call.1} parent=5 // pred_check
        _
      $region50: #{tpu_custom_call.1} parent=5 // pred_check_branch
        %269 = sbr.rel (%p266) target = $region52
      $region51: #{tpu_custom_call.1} parent=5 // pred_region
        %s270 = ssub.s32 %s17, 1
        %p271 = scmp.lt.s32.totalorder %s22, 1
        %s272 = scalar_select %p271, %s22, 1
        %s273 = smul.addr %s272, 4
        %s274 = smul.addr %s273, 8
        %s275 = scalar_lea.vmem %s0, %s274
        %p276 = pneg %p43
        %p277 = pneg %p40
        %p278 = pneg %p64
        %p279 = pneg %p61
        %p280 = pneg %p85
        %p281 = pneg %p82
        %p282 = pneg %p106
        %p283 = pneg %p103
        %p284 = pneg %p127
        %p285 = pneg %p124
        %p286 = pneg %p148
        %p287 = pneg %p145
        %p288 = pneg %p169
        %p289 = pneg %p166
        %p290 = pneg %p190
        %p291 = pneg %p187
        %p292 = pneg %p216
        %p293 = pneg %p213
        %s294 = sand.u32 %s203, 1
        %s295 = scalar_lea.sflag [#allocation4], %s294
        %s296 = sand.u32 %s203, 1
        %s297 = smul.addr %s296, 8
        %s298 = scalar_lea.vmem [#allocation3], %s297
        %p299 = scmp.lt.s32.totalorder %s22, 1
        %s300 = scalar_select %p299, %s22, 1
        %s301 = smul.addr %s300, 4
        %s302 = smul.addr %s301, 8
        %s303 = scalar_lea.vmem %s0, %s302
        %v304 = vlaneseq
        %v305 = vshrl.u32 %v304, 7
        %v306 = vadd.s32 %v305, 8
        %vm307 = vcmp.lt.s32.totalorder %v305, 0
        %v308 = vsub.s32 0, %v305
        %v309 = vsel %vm307, %v308, %v305
        %v310 = vshrl.u32 %v309, 2
        %v311 = vand.u32 %v309, 3
        %v312 = vsub.s32 0, %v311
        %v313 = vsel %vm307, %v312, %v311
        %vm314 = vcmp.lt.s32.totalorder %v306, 0
        %v315 = vsub.s32 0, %v306
        %v316 = vsel %vm314, %v315, %v306
        %v317 = vshrl.u32 %v316, 2
        %v318 = vand.u32 %v316, 3
        %v319 = vsub.s32 0, %v318
        %v320 = vsel %vm314, %v319, %v318
        %vm321 = vcmp.ne.s32.totalorder %v313, 0
        %vm322 = vcmp.ne.s32.totalorder %v320, 0
        %vm323 = vcmp.lt.s32.totalorder %v313, 0
        %vm324 = vcmp.lt.s32.totalorder %v320, 0
        %vm325 = vmand %vm323, %vm321
        %vm326 = vmand %vm324, %vm322
        %v327 = vadd.s32 %v313, 4
        %v328 = vadd.s32 %v320, 4
        %v329 = vsel %vm325, %v327, %v313
        %v330 = vsel %vm326, %v328, %v320
        %vm331 = vcmp.gt.s32.totalorder %v329, 0
        %vm332 = vcmp.gt.s32.totalorder %v330, 0
        %v333 = vsel %vm331, 1, 0
        %v334 = vsel %vm332, 1, 0
        %v335 = vcvt.s32.f32 %v333
        %v336 = vcvt.s32.f32 %v334
        %vm337 = vcmp.lt.s32.totalorder %v329, 3
        %vm338 = vcmp.lt.s32.totalorder %v330, 3
        %v339 = vsel %vm337, 1, 0
        %v340 = vsel %vm338, 1, 0
        %v341 = vcvt.s32.f32 %v339
        %v342 = vcvt.s32.f32 %v340
        %v343 = vld [vmem:[%s303] sm:$0xff]
        %v344 = vld [vmem:[%s303 + $0x8] sm:$0xff]
        %v345 = vmul.f32 %v343, %v335
        %v346 = vmul.f32 %v344, %v336
        %v347 = vld [vmem:[%s1] sm:$0xff]
        %v348 = vld [vmem:[%s303 + $0x1] sm:$0xff]
        %v349 = vld [vmem:[%s303 + $0x9] sm:$0xff]
        %s350 = scalar_lea.vmem %s1, 8
        %v351 = vld [vmem:[%s350] sm:$0xff]
        %vm352 = vcmask 64512
        %v354 = vsel %vm352, %v348, 0
        %v357 = vsel %vm352, %v349, 0
        %359 = vmatprep.subr.mxu0 0.0
        %360 = vmatpush1.msra.mxu0 %v351
        %361 = vmatprep.subr.mxu0 0.0
        %362 = vmatpush1.msra.mxu0 0.0
        %363 = vmatprep.subr.mxu0 0.0
        %364 = vmatpush1.msra.mxu0 0.0
        %365 = vmatprep.subr.mxu0 0.0
        %366 = vmatpush1.msra.mxu0 0.0
        %367 = vmatprep.subr.mxu0 0.0
        %368 = vmatpush1.msra.mxu0 0.0
        %369 = vmatprep.subr.mxu0 0.0
        %370 = vmatpush1.msra.mxu0 0.0
        %371 = vmatprep.subr.mxu0 0.0
        %372 = vmatpush1.msra.mxu0 0.0
        %373 = vmatprep.subr.mxu0 0.0
        %374 = vmatpush1.msra.mxu0 0.0
        %375 = vmatprep.subr.mxu0 0.0
        %376 = vmatpush1.msra.mxu0 0.0
        %377 = vmatprep.subr.mxu0 0.0
        %378 = vmatpush1.msra.mxu0 0.0
        %379 = vmatprep.subr.mxu0 0.0
        %380 = vmatpush1.msra.mxu0 0.0
        %381 = vmatprep.subr.mxu0 0.0
        %382 = vmatpush1.msra.mxu0 0.0
        %383 = vmatprep.subr.mxu0 0.0
        %384 = vmatpush1.msra.mxu0 0.0
        %385 = vmatprep.subr.mxu0 0.0
        %386 = vmatpush1.msra.mxu0 0.0
        %387 = vmatprep.subr.mxu0 0.0
        %388 = vmatpush1.msra.mxu0 0.0
        %389 = vmatprep.subr.mxu0 0.0
        %390 = vmatpush1.msra.mxu0 0.0
        %391 = vmatprep.subr.mxu0 0.0
        %392 = vmatpush1.msra.mxu0 0.0
        %393 = vmatprep.subr.mxu0 0.0
        %394 = vmatpush1.msra.mxu0 0.0
        %395 = vmatprep.subr.mxu0 0.0
        %396 = vmatpush1.msra.mxu0 0.0
        %397 = vmatprep.subr.mxu0 0.0
        %398 = vmatpush1.msra.mxu0 0.0
        %399 = vmatprep.subr.mxu0 0.0
        %400 = vmatpush1.msra.mxu0 0.0
        %401 = vmatprep.subr.mxu0 0.0
        %402 = vmatpush1.msra.mxu0 0.0
        %403 = vmatprep.subr.mxu0 0.0
        %404 = vmatpush1.msra.mxu0 0.0
        %405 = vmatprep.subr.mxu0 0.0
        %406 = vmatpush1.msra.mxu0 0.0
        %407 = vmatprep.subr.mxu0 0.0
        %408 = vmatpush1.msra.mxu0 0.0
        %409 = vmatprep.subr.mxu0 0.0
        %410 = vmatpush1.msra.mxu0 0.0
        %411 = vmatprep.subr.mxu0 0.0
        %412 = vmatpush1.msra.mxu0 0.0
        %413 = vmatprep.subr.mxu0 0.0
        %414 = vmatpush1.msra.mxu0 0.0
        %415 = vmatprep.subr.mxu0 0.0
        %416 = vmatpush1.msra.mxu0 0.0
        %417 = vmatprep.subr.mxu0 0.0
        %418 = vmatpush1.msra.mxu0 0.0
        %419 = vmatprep.subr.mxu0 0.0
        %420 = vmatpush1.msra.mxu0 0.0
        %421 = vmatprep.subr.mxu0 0.0
        %422 = vmatpush1.msra.mxu0 0.0
        %423 = vmatprep.mubr.f32.mxu0 0.0
        %424 = vmatmul.mubr.f32.gmra.mrb[0].mxu0 %v354
        %v425 = vpop.f32.mrb[0].mxu0
        %v426 = vadd.f32 0.0, %v425
        %v427 = vpop.f32.mrb[0].mxu0
        %428 = vmatprep.mubr.f32.mxu0 0.0
        %429 = vmatmul.mubr.f32.gmra.mrb[0].mxu0 %v357
        %v430 = vpop.f32.mrb[0].mxu0
        %v431 = vadd.f32 0.0, %v430
        %v432 = vpop.f32.mrb[0].mxu0
        %433 = vdwg.mxu0
        %v435 = vsel %vm352, %v345, 0
        %v438 = vsel %vm352, %v346, 0
        %440 = vmatprep.subr.mxu0 0.0
        %441 = vmatpush1.msra.mxu0 %v347
        %442 = vmatprep.subr.mxu0 0.0
        %443 = vmatpush1.msra.mxu0 0.0
        %444 = vmatprep.subr.mxu0 0.0
        %445 = vmatpush1.msra.mxu0 0.0
        %446 = vmatprep.subr.mxu0 0.0
        %447 = vmatpush1.msra.mxu0 0.0
        %448 = vmatprep.subr.mxu0 0.0
        %449 = vmatpush1.msra.mxu0 0.0
        %450 = vmatprep.subr.mxu0 0.0
        %451 = vmatpush1.msra.mxu0 0.0
        %452 = vmatprep.subr.mxu0 0.0
        %453 = vmatpush1.msra.mxu0 0.0
        %454 = vmatprep.subr.mxu0 0.0
        %455 = vmatpush1.msra.mxu0 0.0
        %456 = vmatprep.subr.mxu0 0.0
        %457 = vmatpush1.msra.mxu0 0.0
        %458 = vmatprep.subr.mxu0 0.0
        %459 = vmatpush1.msra.mxu0 0.0
        %460 = vmatprep.subr.mxu0 0.0
        %461 = vmatpush1.msra.mxu0 0.0
        %462 = vmatprep.subr.mxu0 0.0
        %463 = vmatpush1.msra.mxu0 0.0
        %464 = vmatprep.subr.mxu0 0.0
        %465 = vmatpush1.msra.mxu0 0.0
        %466 = vmatprep.subr.mxu0 0.0
        %467 = vmatpush1.msra.mxu0 0.0
        %468 = vmatprep.subr.mxu0 0.0
        %469 = vmatpush1.msra.mxu0 0.0
        %470 = vmatprep.subr.mxu0 0.0
        %471 = vmatpush1.msra.mxu0 0.0
        %472 = vmatprep.subr.mxu0 0.0
        %473 = vmatpush1.msra.mxu0 0.0
        %474 = vmatprep.subr.mxu0 0.0
        %475 = vmatpush1.msra.mxu0 0.0
        %476 = vmatprep.subr.mxu0 0.0
        %477 = vmatpush1.msra.mxu0 0.0
        %478 = vmatprep.subr.mxu0 0.0
        %479 = vmatpush1.msra.mxu0 0.0
        %480 = vmatprep.subr.mxu0 0.0
        %481 = vmatpush1.msra.mxu0 0.0
        %482 = vmatprep.subr.mxu0 0.0
        %483 = vmatpush1.msra.mxu0 0.0
        %484 = vmatprep.subr.mxu0 0.0
        %485 = vmatpush1.msra.mxu0 0.0
        %486 = vmatprep.subr.mxu0 0.0
        %487 = vmatpush1.msra.mxu0 0.0
        %488 = vmatprep.subr.mxu0 0.0
        %489 = vmatpush1.msra.mxu0 0.0
        %490 = vmatprep.subr.mxu0 0.0
        %491 = vmatpush1.msra.mxu0 0.0
        %492 = vmatprep.subr.mxu0 0.0
        %493 = vmatpush1.msra.mxu0 0.0
        %494 = vmatprep.subr.mxu0 0.0
        %495 = vmatpush1.msra.mxu0 0.0
        %496 = vmatprep.subr.mxu0 0.0
        %497 = vmatpush1.msra.mxu0 0.0
        %498 = vmatprep.subr.mxu0 0.0
        %499 = vmatpush1.msra.mxu0 0.0
        %500 = vmatprep.subr.mxu0 0.0
        %501 = vmatpush1.msra.mxu0 0.0
        %502 = vmatprep.subr.mxu0 0.0
        %503 = vmatpush1.msra.mxu0 0.0
        %504 = vmatprep.mubr.f32.mxu0 0.0
        %505 = vmatmul.mubr.f32.gmra.mrb[0].mxu0 %v435
        %v506 = vpop.f32.mrb[0].mxu0
        %v507 = vadd.f32 %v426, %v506
        %v508 = vpop.f32.mrb[0].mxu0
        %509 = vmatprep.mubr.f32.mxu0 0.0
        %510 = vmatmul.mubr.f32.gmra.mrb[0].mxu0 %v438
        %v511 = vpop.f32.mrb[0].mxu0
        %v512 = vadd.f32 %v431, %v511
        %v513 = vpop.f32.mrb[0].mxu0
        %514 = vdwg.mxu0
        %v515 = vld [vmem:[%s303 + $0x2] sm:$0xff]
        %v516 = vld [vmem:[%s303 + $0xa] sm:$0xff]
        %v517 = vmul.f32 %v515, %v341
        %v518 = vmul.f32 %v516, %v342
        %s519 = scalar_lea.vmem %s1, 16
        %v520 = vld [vmem:[%s519] sm:$0xff]
        %v522 = vsel %vm352, %v517, 0
        %v525 = vsel %vm352, %v518, 0
        %527 = vmatprep.subr.mxu0 0.0
        %528 = vmatpush1.msra.mxu0 %v520
        %529 = vmatprep.subr.mxu0 0.0
        %530 = vmatpush1.msra.mxu0 0.0
        %531 = vmatprep.subr.mxu0 0.0
        %532 = vmatpush1.msra.mxu0 0.0
        %533 = vmatprep.subr.mxu0 0.0
        %534 = vmatpush1.msra.mxu0 0.0
        %535 = vmatprep.subr.mxu0 0.0
        %536 = vmatpush1.msra.mxu0 0.0
        %537 = vmatprep.subr.mxu0 0.0
        %538 = vmatpush1.msra.mxu0 0.0
        %539 = vmatprep.subr.mxu0 0.0
        %540 = vmatpush1.msra.mxu0 0.0
        %541 = vmatprep.subr.mxu0 0.0
        %542 = vmatpush1.msra.mxu0 0.0
        %543 = vmatprep.subr.mxu0 0.0
        %544 = vmatpush1.msra.mxu0 0.0
        %545 = vmatprep.subr.mxu0 0.0
        %546 = vmatpush1.msra.mxu0 0.0
        %547 = vmatprep.subr.mxu0 0.0
        %548 = vmatpush1.msra.mxu0 0.0
        %549 = vmatprep.subr.mxu0 0.0
        %550 = vmatpush1.msra.mxu0 0.0
        %551 = vmatprep.subr.mxu0 0.0
        %552 = vmatpush1.msra.mxu0 0.0
        %553 = vmatprep.subr.mxu0 0.0
        %554 = vmatpush1.msra.mxu0 0.0
        %555 = vmatprep.subr.mxu0 0.0
        %556 = vmatpush1.msra.mxu0 0.0
        %557 = vmatprep.subr.mxu0 0.0
        %558 = vmatpush1.msra.mxu0 0.0
        %559 = vmatprep.subr.mxu0 0.0
        %560 = vmatpush1.msra.mxu0 0.0
        %561 = vmatprep.subr.mxu0 0.0
        %562 = vmatpush1.msra.mxu0 0.0
        %563 = vmatprep.subr.mxu0 0.0
        %564 = vmatpush1.msra.mxu0 0.0
        %565 = vmatprep.subr.mxu0 0.0
        %566 = vmatpush1.msra.mxu0 0.0
        %567 = vmatprep.subr.mxu0 0.0
        %568 = vmatpush1.msra.mxu0 0.0
        %569 = vmatprep.subr.mxu0 0.0
        %570 = vmatpush1.msra.mxu0 0.0
        %571 = vmatprep.subr.mxu0 0.0
        %572 = vmatpush1.msra.mxu0 0.0
        %573 = vmatprep.subr.mxu0 0.0
        %574 = vmatpush1.msra.mxu0 0.0
        %575 = vmatprep.subr.mxu0 0.0
        %576 = vmatpush1.msra.mxu0 0.0
        %577 = vmatprep.subr.mxu0 0.0
        %578 = vmatpush1.msra.mxu0 0.0
        %579 = vmatprep.subr.mxu0 0.0
        %580 = vmatpush1.msra.mxu0 0.0
        %581 = vmatprep.subr.mxu0 0.0
        %582 = vmatpush1.msra.mxu0 0.0
        %583 = vmatprep.subr.mxu0 0.0
        %584 = vmatpush1.msra.mxu0 0.0
        %585 = vmatprep.subr.mxu0 0.0
        %586 = vmatpush1.msra.mxu0 0.0
        %587 = vmatprep.subr.mxu0 0.0
        %588 = vmatpush1.msra.mxu0 0.0
        %589 = vmatprep.subr.mxu0 0.0
        %590 = vmatpush1.msra.mxu0 0.0
        %591 = vmatprep.mubr.f32.mxu0 0.0
        %592 = vmatmul.mubr.f32.gmra.mrb[0].mxu0 %v522
        %v593 = vpop.f32.mrb[0].mxu0
        %v594 = vadd.f32 0.0, %v593
        %v595 = vpop.f32.mrb[0].mxu0
        %596 = vmatprep.mubr.f32.mxu0 0.0
        %597 = vmatmul.mubr.f32.gmra.mrb[0].mxu0 %v525
        %v598 = vpop.f32.mrb[0].mxu0
        %v599 = vadd.f32 0.0, %v598
        %v600 = vpop.f32.mrb[0].mxu0
        %601 = vdwg.mxu0
        %v602 = vadd.f32 %v507, %v594
        %v603 = vadd.f32 %v512, %v599
        %v604 = vld [vmem:[%s303 + $0x4] sm:$0xff]
        %v605 = vld [vmem:[%s303 + $0xc] sm:$0xff]
        %v606 = vmul.f32 %v604, %v335
        %v607 = vmul.f32 %v605, %v336
        %s608 = scalar_lea.vmem %s1, 24
        %v609 = vld [vmem:[%s608] sm:$0xff]
        %v611 = vsel %vm352, %v606, 0
        %v614 = vsel %vm352, %v607, 0
        %616 = vmatprep.subr.mxu0 0.0
        %617 = vmatpush1.msra.mxu0 %v609
        %618 = vmatprep.subr.mxu0 0.0
        %619 = vmatpush1.msra.mxu0 0.0
        %620 = vmatprep.subr.mxu0 0.0
        %621 = vmatpush1.msra.mxu0 0.0
        %622 = vmatprep.subr.mxu0 0.0
        %623 = vmatpush1.msra.mxu0 0.0
        %624 = vmatprep.subr.mxu0 0.0
        %625 = vmatpush1.msra.mxu0 0.0
        %626 = vmatprep.subr.mxu0 0.0
        %627 = vmatpush1.msra.mxu0 0.0
        %628 = vmatprep.subr.mxu0 0.0
        %629 = vmatpush1.msra.mxu0 0.0
        %630 = vmatprep.subr.mxu0 0.0
        %631 = vmatpush1.msra.mxu0 0.0
        %632 = vmatprep.subr.mxu0 0.0
        %633 = vmatpush1.msra.mxu0 0.0
        %634 = vmatprep.subr.mxu0 0.0
        %635 = vmatpush1.msra.mxu0 0.0
        %636 = vmatprep.subr.mxu0 0.0
        %637 = vmatpush1.msra.mxu0 0.0
        %638 = vmatprep.subr.mxu0 0.0
        %639 = vmatpush1.msra.mxu0 0.0
        %640 = vmatprep.subr.mxu0 0.0
        %641 = vmatpush1.msra.mxu0 0.0
        %642 = vmatprep.subr.mxu0 0.0
        %643 = vmatpush1.msra.mxu0 0.0
        %644 = vmatprep.subr.mxu0 0.0
        %645 = vmatpush1.msra.mxu0 0.0
        %646 = vmatprep.subr.mxu0 0.0
        %647 = vmatpush1.msra.mxu0 0.0
        %648 = vmatprep.subr.mxu0 0.0
        %649 = vmatpush1.msra.mxu0 0.0
        %650 = vmatprep.subr.mxu0 0.0
        %651 = vmatpush1.msra.mxu0 0.0
        %652 = vmatprep.subr.mxu0 0.0
        %653 = vmatpush1.msra.mxu0 0.0
        %654 = vmatprep.subr.mxu0 0.0
        %655 = vmatpush1.msra.mxu0 0.0
        %656 = vmatprep.subr.mxu0 0.0
        %657 = vmatpush1.msra.mxu0 0.0
        %658 = vmatprep.subr.mxu0 0.0
        %659 = vmatpush1.msra.mxu0 0.0
        %660 = vmatprep.subr.mxu0 0.0
        %661 = vmatpush1.msra.mxu0 0.0
        %662 = vmatprep.subr.mxu0 0.0
        %663 = vmatpush1.msra.mxu0 0.0
        %664 = vmatprep.subr.mxu0 0.0
        %665 = vmatpush1.msra.mxu0 0.0
        %666 = vmatprep.subr.mxu0 0.0
        %667 = vmatpush1.msra.mxu0 0.0
        %668 = vmatprep.subr.mxu0 0.0
        %669 = vmatpush1.msra.mxu0 0.0
        %670 = vmatprep.subr.mxu0 0.0
        %671 = vmatpush1.msra.mxu0 0.0
        %672 = vmatprep.subr.mxu0 0.0
        %673 = vmatpush1.msra.mxu0 0.0
        %674 = vmatprep.subr.mxu0 0.0
        %675 = vmatpush1.msra.mxu0 0.0
        %676 = vmatprep.subr.mxu0 0.0
        %677 = vmatpush1.msra.mxu0 0.0
        %678 = vmatprep.subr.mxu0 0.0
        %679 = vmatpush1.msra.mxu0 0.0
        %680 = vmatprep.mubr.f32.mxu0 0.0
        %681 = vmatmul.mubr.f32.gmra.mrb[0].mxu0 %v611
        %v682 = vpop.f32.mrb[0].mxu0
        %v683 = vadd.f32 0.0, %v682
        %v684 = vpop.f32.mrb[0].mxu0
        %685 = vmatprep.mubr.f32.mxu0 0.0
        %686 = vmatmul.mubr.f32.gmra.mrb[0].mxu0 %v614
        %v687 = vpop.f32.mrb[0].mxu0
        %v688 = vadd.f32 0.0, %v687
        %v689 = vpop.f32.mrb[0].mxu0
        %690 = vdwg.mxu0
        %v691 = vadd.f32 %v602, %v683
        %v692 = vadd.f32 %v603, %v688
        %v693 = vld [vmem:[%s303 + $0x5] sm:$0xff]
        %v694 = vld [vmem:[%s303 + $0xd] sm:$0xff]
        %s695 = scalar_lea.vmem %s1, 32
        %v696 = vld [vmem:[%s695] sm:$0xff]
        %v698 = vsel %vm352, %v693, 0
        %v701 = vsel %vm352, %v694, 0
        %703 = vmatprep.subr.mxu0 0.0
        %704 = vmatpush1.msra.mxu0 %v696
        %705 = vmatprep.subr.mxu0 0.0
        %706 = vmatpush1.msra.mxu0 0.0
        %707 = vmatprep.subr.mxu0 0.0
        %708 = vmatpush1.msra.mxu0 0.0
        %709 = vmatprep.subr.mxu0 0.0
        %710 = vmatpush1.msra.mxu0 0.0
        %711 = vmatprep.subr.mxu0 0.0
        %712 = vmatpush1.msra.mxu0 0.0
        %713 = vmatprep.subr.mxu0 0.0
        %714 = vmatpush1.msra.mxu0 0.0
        %715 = vmatprep.subr.mxu0 0.0
        %716 = vmatpush1.msra.mxu0 0.0
        %717 = vmatprep.subr.mxu0 0.0
        %718 = vmatpush1.msra.mxu0 0.0
        %719 = vmatprep.subr.mxu0 0.0
        %720 = vmatpush1.msra.mxu0 0.0
        %721 = vmatprep.subr.mxu0 0.0
        %722 = vmatpush1.msra.mxu0 0.0
        %723 = vmatprep.subr.mxu0 0.0
        %724 = vmatpush1.msra.mxu0 0.0
        %725 = vmatprep.subr.mxu0 0.0
        %726 = vmatpush1.msra.mxu0 0.0
        %727 = vmatprep.subr.mxu0 0.0
        %728 = vmatpush1.msra.mxu0 0.0
        %729 = vmatprep.subr.mxu0 0.0
        %730 = vmatpush1.msra.mxu0 0.0
        %731 = vmatprep.subr.mxu0 0.0
        %732 = vmatpush1.msra.mxu0 0.0
        %733 = vmatprep.subr.mxu0 0.0
        %734 = vmatpush1.msra.mxu0 0.0
        %735 = vmatprep.subr.mxu0 0.0
        %736 = vmatpush1.msra.mxu0 0.0
        %737 = vmatprep.subr.mxu0 0.0
        %738 = vmatpush1.msra.mxu0 0.0
        %739 = vmatprep.subr.mxu0 0.0
        %740 = vmatpush1.msra.mxu0 0.0
        %741 = vmatprep.subr.mxu0 0.0
        %742 = vmatpush1.msra.mxu0 0.0
        %743 = vmatprep.subr.mxu0 0.0
        %744 = vmatpush1.msra.mxu0 0.0
        %745 = vmatprep.subr.mxu0 0.0
        %746 = vmatpush1.msra.mxu0 0.0
        %747 = vmatprep.subr.mxu0 0.0
        %748 = vmatpush1.msra.mxu0 0.0
        %749 = vmatprep.subr.mxu0 0.0
        %750 = vmatpush1.msra.mxu0 0.0
        %751 = vmatprep.subr.mxu0 0.0
        %752 = vmatpush1.msra.mxu0 0.0
        %753 = vmatprep.subr.mxu0 0.0
        %754 = vmatpush1.msra.mxu0 0.0
        %755 = vmatprep.subr.mxu0 0.0
        %756 = vmatpush1.msra.mxu0 0.0
        %757 = vmatprep.subr.mxu0 0.0
        %758 = vmatpush1.msra.mxu0 0.0
        %759 = vmatprep.subr.mxu0 0.0
        %760 = vmatpush1.msra.mxu0 0.0
        %761 = vmatprep.subr.mxu0 0.0
        %762 = vmatpush1.msra.mxu0 0.0
        %763 = vmatprep.subr.mxu0 0.0
        %764 = vmatpush1.msra.mxu0 0.0
        %765 = vmatprep.subr.mxu0 0.0
        %766 = vmatpush1.msra.mxu0 0.0
        %767 = vmatprep.mubr.f32.mxu0 0.0
        %768 = vmatmul.mubr.f32.gmra.mrb[0].mxu0 %v698
        %v769 = vpop.f32.mrb[0].mxu0
        %v770 = vadd.f32 0.0, %v769
        %v771 = vpop.f32.mrb[0].mxu0
        %772 = vmatprep.mubr.f32.mxu0 0.0
        %773 = vmatmul.mubr.f32.gmra.mrb[0].mxu0 %v701
        %v774 = vpop.f32.mrb[0].mxu0
        %v775 = vadd.f32 0.0, %v774
        %v776 = vpop.f32.mrb[0].mxu0
        %777 = vdwg.mxu0
        %v778 = vadd.f32 %v691, %v770
        %v779 = vadd.f32 %v692, %v775
        %v780 = vld [vmem:[%s303 + $0x6] sm:$0xff]
        %v781 = vld [vmem:[%s303 + $0xe] sm:$0xff]
        %v782 = vmul.f32 %v780, %v341
        %v783 = vmul.f32 %v781, %v342
        %s784 = scalar_lea.vmem %s1, 40
        %v785 = vld [vmem:[%s784] sm:$0xff]
        %v787 = vsel %vm352, %v782, 0
        %v790 = vsel %vm352, %v783, 0
        %792 = vmatprep.subr.mxu0 0.0
        %793 = vmatpush1.msra.mxu0 %v785
        %794 = vmatprep.subr.mxu0 0.0
        %795 = vmatpush1.msra.mxu0 0.0
        %796 = vmatprep.subr.mxu0 0.0
        %797 = vmatpush1.msra.mxu0 0.0
        %798 = vmatprep.subr.mxu0 0.0
        %799 = vmatpush1.msra.mxu0 0.0
        %800 = vmatprep.subr.mxu0 0.0
        %801 = vmatpush1.msra.mxu0 0.0
        %802 = vmatprep.subr.mxu0 0.0
        %803 = vmatpush1.msra.mxu0 0.0
        %804 = vmatprep.subr.mxu0 0.0
        %805 = vmatpush1.msra.mxu0 0.0
        %806 = vmatprep.subr.mxu0 0.0
        %807 = vmatpush1.msra.mxu0 0.0
        %808 = vmatprep.subr.mxu0 0.0
        %809 = vmatpush1.msra.mxu0 0.0
        %810 = vmatprep.subr.mxu0 0.0
        %811 = vmatpush1.msra.mxu0 0.0
        %812 = vmatprep.subr.mxu0 0.0
        %813 = vmatpush1.msra.mxu0 0.0
        %814 = vmatprep.subr.mxu0 0.0
        %815 = vmatpush1.msra.mxu0 0.0
        %816 = vmatprep.subr.mxu0 0.0
        %817 = vmatpush1.msra.mxu0 0.0
        %818 = vmatprep.subr.mxu0 0.0
        %819 = vmatpush1.msra.mxu0 0.0
        %820 = vmatprep.subr.mxu0 0.0
        %821 = vmatpush1.msra.mxu0 0.0
        %822 = vmatprep.subr.mxu0 0.0
        %823 = vmatpush1.msra.mxu0 0.0
        %824 = vmatprep.subr.mxu0 0.0
        %825 = vmatpush1.msra.mxu0 0.0
        %826 = vmatprep.subr.mxu0 0.0
        %827 = vmatpush1.msra.mxu0 0.0
        %828 = vmatprep.subr.mxu0 0.0
        %829 = vmatpush1.msra.mxu0 0.0
        %830 = vmatprep.subr.mxu0 0.0
        %831 = vmatpush1.msra.mxu0 0.0
        %832 = vmatprep.subr.mxu0 0.0
        %833 = vmatpush1.msra.mxu0 0.0
        %834 = vmatprep.subr.mxu0 0.0
        %835 = vmatpush1.msra.mxu0 0.0
        %836 = vmatprep.subr.mxu0 0.0
        %837 = vmatpush1.msra.mxu0 0.0
        %838 = vmatprep.subr.mxu0 0.0
        %839 = vmatpush1.msra.mxu0 0.0
        %840 = vmatprep.subr.mxu0 0.0
        %841 = vmatpush1.msra.mxu0 0.0
        %842 = vmatprep.subr.mxu0 0.0
        %843 = vmatpush1.msra.mxu0 0.0
        %844 = vmatprep.subr.mxu0 0.0
        %845 = vmatpush1.msra.mxu0 0.0
        %846 = vmatprep.subr.mxu0 0.0
        %847 = vmatpush1.msra.mxu0 0.0
        %848 = vmatprep.subr.mxu0 0.0
        %849 = vmatpush1.msra.mxu0 0.0
        %850 = vmatprep.subr.mxu0 0.0
        %851 = vmatpush1.msra.mxu0 0.0
        %852 = vmatprep.subr.mxu0 0.0
        %853 = vmatpush1.msra.mxu0 0.0
        %854 = vmatprep.subr.mxu0 0.0
        %855 = vmatpush1.msra.mxu0 0.0
        %856 = vmatprep.mubr.f32.mxu0 0.0
        %857 = vmatmul.mubr.f32.gmra.mrb[0].mxu0 %v787
        %v858 = vpop.f32.mrb[0].mxu0
        %v859 = vadd.f32 0.0, %v858
        %v860 = vpop.f32.mrb[0].mxu0
        %861 = vmatprep.mubr.f32.mxu0 0.0
        %862 = vmatmul.mubr.f32.gmra.mrb[0].mxu0 %v790
        %v863 = vpop.f32.mrb[0].mxu0
        %v864 = vadd.f32 0.0, %v863
        %v865 = vpop.f32.mrb[0].mxu0
        %866 = vdwg.mxu0
        %v867 = vadd.f32 %v778, %v859
        %v868 = vadd.f32 %v779, %v864
        %v869 = vld [vmem:[%s303 + $0x8] sm:$0xff]
        %v870 = vld [vmem:[%s303 + $0x10] sm:$0xff]
        %v871 = vmul.f32 %v869, %v335
        %v872 = vmul.f32 %v870, %v336
        %s873 = scalar_lea.vmem %s1, 48
        %v874 = vld [vmem:[%s873] sm:$0xff]
        %v876 = vsel %vm352, %v871, 0
        %v879 = vsel %vm352, %v872, 0
        %881 = vmatprep.subr.mxu0 0.0
        %882 = vmatpush1.msra.mxu0 %v874
        %883 = vmatprep.subr.mxu0 0.0
        %884 = vmatpush1.msra.mxu0 0.0
        %885 = vmatprep.subr.mxu0 0.0
        %886 = vmatpush1.msra.mxu0 0.0
        %887 = vmatprep.subr.mxu0 0.0
        %888 = vmatpush1.msra.mxu0 0.0
        %889 = vmatprep.subr.mxu0 0.0
        %890 = vmatpush1.msra.mxu0 0.0
        %891 = vmatprep.subr.mxu0 0.0
        %892 = vmatpush1.msra.mxu0 0.0
        %893 = vmatprep.subr.mxu0 0.0
        %894 = vmatpush1.msra.mxu0 0.0
        %895 = vmatprep.subr.mxu0 0.0
        %896 = vmatpush1.msra.mxu0 0.0
        %897 = vmatprep.subr.mxu0 0.0
        %898 = vmatpush1.msra.mxu0 0.0
        %899 = vmatprep.subr.mxu0 0.0
        %900 = vmatpush1.msra.mxu0 0.0
        %901 = vmatprep.subr.mxu0 0.0
        %902 = vmatpush1.msra.mxu0 0.0
        %903 = vmatprep.subr.mxu0 0.0
        %904 = vmatpush1.msra.mxu0 0.0
        %905 = vmatprep.subr.mxu0 0.0
        %906 = vmatpush1.msra.mxu0 0.0
        %907 = vmatprep.subr.mxu0 0.0
        %908 = vmatpush1.msra.mxu0 0.0
        %909 = vmatprep.subr.mxu0 0.0
        %910 = vmatpush1.msra.mxu0 0.0
        %911 = vmatprep.subr.mxu0 0.0
        %912 = vmatpush1.msra.mxu0 0.0
        %913 = vmatprep.subr.mxu0 0.0
        %914 = vmatpush1.msra.mxu0 0.0
        %915 = vmatprep.subr.mxu0 0.0
        %916 = vmatpush1.msra.mxu0 0.0
        %917 = vmatprep.subr.mxu0 0.0
        %918 = vmatpush1.msra.mxu0 0.0
        %919 = vmatprep.subr.mxu0 0.0
        %920 = vmatpush1.msra.mxu0 0.0
        %921 = vmatprep.subr.mxu0 0.0
        %922 = vmatpush1.msra.mxu0 0.0
        %923 = vmatprep.subr.mxu0 0.0
        %924 = vmatpush1.msra.mxu0 0.0
        %925 = vmatprep.subr.mxu0 0.0
        %926 = vmatpush1.msra.mxu0 0.0
        %927 = vmatprep.subr.mxu0 0.0
        %928 = vmatpush1.msra.mxu0 0.0
        %929 = vmatprep.subr.mxu0 0.0
        %930 = vmatpush1.msra.mxu0 0.0
        %931 = vmatprep.subr.mxu0 0.0
        %932 = vmatpush1.msra.mxu0 0.0
        %933 = vmatprep.subr.mxu0 0.0
        %934 = vmatpush1.msra.mxu0 0.0
        %935 = vmatprep.subr.mxu0 0.0
        %936 = vmatpush1.msra.mxu0 0.0
        %937 = vmatprep.subr.mxu0 0.0
        %938 = vmatpush1.msra.mxu0 0.0
        %939 = vmatprep.subr.mxu0 0.0
        %940 = vmatpush1.msra.mxu0 0.0
        %941 = vmatprep.subr.mxu0 0.0
        %942 = vmatpush1.msra.mxu0 0.0
        %943 = vmatprep.subr.mxu0 0.0
        %944 = vmatpush1.msra.mxu0 0.0
        %945 = vmatprep.mubr.f32.mxu0 0.0
        %946 = vmatmul.mubr.f32.gmra.mrb[0].mxu0 %v876
        %v947 = vpop.f32.mrb[0].mxu0
        %v948 = vadd.f32 0.0, %v947
        %v949 = vpop.f32.mrb[0].mxu0
        %950 = vmatprep.mubr.f32.mxu0 0.0
        %951 = vmatmul.mubr.f32.gmra.mrb[0].mxu0 %v879
        %v952 = vpop.f32.mrb[0].mxu0
        %v953 = vadd.f32 0.0, %v952
        %v954 = vpop.f32.mrb[0].mxu0
        %955 = vdwg.mxu0
        %v956 = vadd.f32 %v867, %v948
        %v957 = vadd.f32 %v868, %v953
        %v958 = vld [vmem:[%s303 + $0x9] sm:$0xff]
        %v959 = vld [vmem:[%s303 + $0x11] sm:$0xff]
        %s960 = scalar_lea.vmem %s1, 56
        %v961 = vld [vmem:[%s960] sm:$0xff]
        %v963 = vsel %vm352, %v958, 0
        %v966 = vsel %vm352, %v959, 0
        %968 = vmatprep.subr.mxu0 0.0
        %969 = vmatpush1.msra.mxu0 %v961
        %970 = vmatprep.subr.mxu0 0.0
        %971 = vmatpush1.msra.mxu0 0.0
        %972 = vmatprep.subr.mxu0 0.0
        %973 = vmatpush1.msra.mxu0 0.0
        %974 = vmatprep.subr.mxu0 0.0
        %975 = vmatpush1.msra.mxu0 0.0
        %976 = vmatprep.subr.mxu0 0.0
        %977 = vmatpush1.msra.mxu0 0.0
        %978 = vmatprep.subr.mxu0 0.0
        %979 = vmatpush1.msra.mxu0 0.0
        %980 = vmatprep.subr.mxu0 0.0
        %981 = vmatpush1.msra.mxu0 0.0
        %982 = vmatprep.subr.mxu0 0.0
        %983 = vmatpush1.msra.mxu0 0.0
        %984 = vmatprep.subr.mxu0 0.0
        %985 = vmatpush1.msra.mxu0 0.0
        %986 = vmatprep.subr.mxu0 0.0
        %987 = vmatpush1.msra.mxu0 0.0
        %988 = vmatprep.subr.mxu0 0.0
        %989 = vmatpush1.msra.mxu0 0.0
        %990 = vmatprep.subr.mxu0 0.0
        %991 = vmatpush1.msra.mxu0 0.0
        %992 = vmatprep.subr.mxu0 0.0
        %993 = vmatpush1.msra.mxu0 0.0
        %994 = vmatprep.subr.mxu0 0.0
        %995 = vmatpush1.msra.mxu0 0.0
        %996 = vmatprep.subr.mxu0 0.0
        %997 = vmatpush1.msra.mxu0 0.0
        %998 = vmatprep.subr.mxu0 0.0
        %999 = vmatpush1.msra.mxu0 0.0
        %1000 = vmatprep.subr.mxu0 0.0
        %1001 = vmatpush1.msra.mxu0 0.0
        %1002 = vmatprep.subr.mxu0 0.0
        %1003 = vmatpush1.msra.mxu0 0.0
        %1004 = vmatprep.subr.mxu0 0.0
        %1005 = vmatpush1.msra.mxu0 0.0
        %1006 = vmatprep.subr.mxu0 0.0
        %1007 = vmatpush1.msra.mxu0 0.0
        %1008 = vmatprep.subr.mxu0 0.0
        %1009 = vmatpush1.msra.mxu0 0.0
        %1010 = vmatprep.subr.mxu0 0.0
        %1011 = vmatpush1.msra.mxu0 0.0
        %1012 = vmatprep.subr.mxu0 0.0
        %1013 = vmatpush1.msra.mxu0 0.0
        %1014 = vmatprep.subr.mxu0 0.0
        %1015 = vmatpush1.msra.mxu0 0.0
        %1016 = vmatprep.subr.mxu0 0.0
        %1017 = vmatpush1.msra.mxu0 0.0
        %1018 = vmatprep.subr.mxu0 0.0
        %1019 = vmatpush1.msra.mxu0 0.0
        %1020 = vmatprep.subr.mxu0 0.0
        %1021 = vmatpush1.msra.mxu0 0.0
        %1022 = vmatprep.subr.mxu0 0.0
        %1023 = vmatpush1.msra.mxu0 0.0
        %1024 = vmatprep.subr.mxu0 0.0
        %1025 = vmatpush1.msra.mxu0 0.0
        %1026 = vmatprep.subr.mxu0 0.0
        %1027 = vmatpush1.msra.mxu0 0.0
        %1028 = vmatprep.subr.mxu0 0.0
        %1029 = vmatpush1.msra.mxu0 0.0
        %1030 = vmatprep.subr.mxu0 0.0
        %1031 = vmatpush1.msra.mxu0 0.0
        %1032 = vmatprep.mubr.f32.mxu0 0.0
        %1033 = vmatmul.mubr.f32.gmra.mrb[0].mxu0 %v963
        %v1034 = vpop.f32.mrb[0].mxu0
        %v1035 = vadd.f32 0.0, %v1034
        %v1036 = vpop.f32.mrb[0].mxu0
        %1037 = vmatprep.mubr.f32.mxu0 0.0
        %1038 = vmatmul.mubr.f32.gmra.mrb[0].mxu0 %v966
        %v1039 = vpop.f32.mrb[0].mxu0
        %v1040 = vadd.f32 0.0, %v1039
        %v1041 = vpop.f32.mrb[0].mxu0
        %1042 = vdwg.mxu0
        %v1043 = vadd.f32 %v956, %v1035
        %v1044 = vadd.f32 %v957, %v1040
        %v1045 = vld [vmem:[%s303 + $0xa] sm:$0xff]
        %v1046 = vld [vmem:[%s303 + $0x12] sm:$0xff]
        %v1047 = vmul.f32 %v1045, %v341
        %v1048 = vmul.f32 %v1046, %v342
        %s1049 = scalar_lea.vmem %s1, 64
        %v1050 = vld [vmem:[%s1049] sm:$0xff]
        %v1052 = vsel %vm352, %v1047, 0
        %v1055 = vsel %vm352, %v1048, 0
        %1057 = vmatprep.subr.mxu0 0.0
        %1058 = vmatpush1.msra.mxu0 %v1050
        %1059 = vmatprep.subr.mxu0 0.0
        %1060 = vmatpush1.msra.mxu0 0.0
        %1061 = vmatprep.subr.mxu0 0.0
        %1062 = vmatpush1.msra.mxu0 0.0
        %1063 = vmatprep.subr.mxu0 0.0
        %1064 = vmatpush1.msra.mxu0 0.0
        %1065 = vmatprep.subr.mxu0 0.0
        %1066 = vmatpush1.msra.mxu0 0.0
        %1067 = vmatprep.subr.mxu0 0.0
        %1068 = vmatpush1.msra.mxu0 0.0
        %1069 = vmatprep.subr.mxu0 0.0
        %1070 = vmatpush1.msra.mxu0 0.0
        %1071 = vmatprep.subr.mxu0 0.0
        %1072 = vmatpush1.msra.mxu0 0.0
        %1073 = vmatprep.subr.mxu0 0.0
        %1074 = vmatpush1.msra.mxu0 0.0
        %1075 = vmatprep.subr.mxu0 0.0
        %1076 = vmatpush1.msra.mxu0 0.0
        %1077 = vmatprep.subr.mxu0 0.0
        %1078 = vmatpush1.msra.mxu0 0.0
        %1079 = vmatprep.subr.mxu0 0.0
        %1080 = vmatpush1.msra.mxu0 0.0
        %1081 = vmatprep.subr.mxu0 0.0
        %1082 = vmatpush1.msra.mxu0 0.0
        %1083 = vmatprep.subr.mxu0 0.0
        %1084 = vmatpush1.msra.mxu0 0.0
        %1085 = vmatprep.subr.mxu0 0.0
        %1086 = vmatpush1.msra.mxu0 0.0
        %1087 = vmatprep.subr.mxu0 0.0
        %1088 = vmatpush1.msra.mxu0 0.0
        %1089 = vmatprep.subr.mxu0 0.0
        %1090 = vmatpush1.msra.mxu0 0.0
        %1091 = vmatprep.subr.mxu0 0.0
        %1092 = vmatpush1.msra.mxu0 0.0
        %1093 = vmatprep.subr.mxu0 0.0
        %1094 = vmatpush1.msra.mxu0 0.0
        %1095 = vmatprep.subr.mxu0 0.0
        %1096 = vmatpush1.msra.mxu0 0.0
        %1097 = vmatprep.subr.mxu0 0.0
        %1098 = vmatpush1.msra.mxu0 0.0
        %1099 = vmatprep.subr.mxu0 0.0
        %1100 = vmatpush1.msra.mxu0 0.0
        %1101 = vmatprep.subr.mxu0 0.0
        %1102 = vmatpush1.msra.mxu0 0.0
        %1103 = vmatprep.subr.mxu0 0.0
        %1104 = vmatpush1.msra.mxu0 0.0
        %1105 = vmatprep.subr.mxu0 0.0
        %1106 = vmatpush1.msra.mxu0 0.0
        %1107 = vmatprep.subr.mxu0 0.0
        %1108 = vmatpush1.msra.mxu0 0.0
        %1109 = vmatprep.subr.mxu0 0.0
        %1110 = vmatpush1.msra.mxu0 0.0
        %1111 = vmatprep.subr.mxu0 0.0
        %1112 = vmatpush1.msra.mxu0 0.0
        %1113 = vmatprep.subr.mxu0 0.0
        %1114 = vmatpush1.msra.mxu0 0.0
        %1115 = vmatprep.subr.mxu0 0.0
        %1116 = vmatpush1.msra.mxu0 0.0
        %1117 = vmatprep.subr.mxu0 0.0
        %1118 = vmatpush1.msra.mxu0 0.0
        %1119 = vmatprep.subr.mxu0 0.0
        %1120 = vmatpush1.msra.mxu0 0.0
        %1121 = vmatprep.mubr.f32.mxu0 0.0
        %1122 = vmatmul.mubr.f32.gmra.mrb[0].mxu0 %v1052
        %v1123 = vpop.f32.mrb[0].mxu0
        %v1124 = vadd.f32 0.0, %v1123
        %v1125 = vpop.f32.mrb[0].mxu0
        %1126 = vmatprep.mubr.f32.mxu0 0.0
        %1127 = vmatmul.mubr.f32.gmra.mrb[0].mxu0 %v1055
        %v1128 = vpop.f32.mrb[0].mxu0
        %v1129 = vadd.f32 0.0, %v1128
        %v1130 = vpop.f32.mrb[0].mxu0
        %1131 = vdwg.mxu0
        %v1132 = vadd.f32 %v1043, %v1124
        %v1133 = vadd.f32 %v1044, %v1129
        %v1134 = vld [vmem:[%s2] sm:$0x1]
        %v1136 = vlaneseq
        %v1137 = vshrl.u32 %v1136, 7
        %v1138 = vsub.s32 0, %v1137
        %v1139 = vrot.slane %v1134, %v1138
        %v1141 = vadd.f32 %v1132, %v1139
        %v1142 = vadd.f32 %v1133, %v1139
        %v1143 = vld [vmem:[%s3] sm:$0x1]
        %v1145 = vlaneseq
        %v1146 = vshrl.u32 %v1145, 7
        %v1147 = vsub.s32 0, %v1146
        %v1148 = vrot.slane %v1143, %v1147
        %v1150 = vmul.f32 %v1141, %v1148
        %v1151 = vmul.f32 %v1142, %v1148
        %v1152 = vld [vmem:[%s4] sm:$0x1]
        %v1154 = vlaneseq
        %v1155 = vshrl.u32 %v1154, 7
        %v1156 = vsub.s32 0, %v1155
        %v1157 = vrot.slane %v1152, %v1156
        %v1159 = vadd.f32 %v1150, %v1157
        %v1160 = vadd.f32 %v1151, %v1157
        %v1161 = vmax.f32 %v1159, 0.0
        %v1162 = vmax.f32 %v1160, 0.0
        %1163 = vst.msk [vmem:[#allocation2] sm:$0xff] %vm352, 0.0
        %1164 = vst.msk [vmem:[#allocation2 + $0x8] sm:$0xff] %vm352, 0.0
        %1165 = vst.msk [vmem:[#allocation2 + $0x10] sm:$0xff] %vm352, 0.0
        %vm1166 = vcmask 58368
        %1167 = vst.msk [vmem:[#allocation2 + $0x18] sm:$0x3] %vm1166, 0.0
        %1168 = vst.msk [vmem:[#allocation2 + $0x5] sm:$0xff] %vm352, %v1161
        %1169 = vst.msk [vmem:[#allocation2 + $0xd] sm:$0xff] %vm352, %v1162
        %v1170 = vld [vmem:[#allocation2] sm:$0xff]
        %v1171 = vld [vmem:[#allocation2 + $0x8] sm:$0xff]
        %v1172 = vmul.f32 %v1170, %v335
        %v1173 = vmul.f32 %v1171, %v336
        %v1174 = vld [vmem:[%s5] sm:$0xf]
        %v1175 = vld [vmem:[#allocation2 + $0x1] sm:$0xff]
        %v1176 = vld [vmem:[#allocation2 + $0x9] sm:$0xff]
        %s1177 = scalar_lea.vmem %s5, 4
        %v1178 = vld [vmem:[%s1177] sm:$0xf]
        %v1180 = vsel %vm352, %v1178, 0
        %v1183 = vsel %vm352, %v1175, 0
        %v1186 = vsel %vm352, %v1176, 0
        %1188 = vmatprep.subr.mxu0 0.0
        %1189 = vmatpush1.xpose.msra.mxu0 %v1183
        %1190 = vmatprep.subr.mxu0 0.0
        %1191 = vmatpush1.xpose.msra.mxu0 %v1186
        %1192 = vmatprep.subr.mxu0 0.0
        %1193 = vmatpush1.xpose.msra.mxu0 0.0
        %1194 = vmatprep.subr.mxu0 0.0
        %1195 = vmatpush1.xpose.msra.mxu0 0.0
        %1196 = vmatprep.subr.mxu0 0.0
        %1197 = vmatpush1.xpose.msra.mxu0 0.0
        %1198 = vmatprep.subr.mxu0 0.0
        %1199 = vmatpush1.xpose.msra.mxu0 0.0
        %1200 = vmatprep.subr.mxu0 0.0
        %1201 = vmatpush1.xpose.msra.mxu0 0.0
        %1202 = vmatprep.subr.mxu0 0.0
        %1203 = vmatpush1.xpose.msra.mxu0 0.0
        %1204 = vmatprep.subr.mxu0 0.0
        %1205 = vmatpush1.xpose.msra.mxu0 0.0
        %1206 = vmatprep.subr.mxu0 0.0
        %1207 = vmatpush1.xpose.msra.mxu0 0.0
        %1208 = vmatprep.subr.mxu0 0.0
        %1209 = vmatpush1.xpose.msra.mxu0 0.0
        %1210 = vmatprep.subr.mxu0 0.0
        %1211 = vmatpush1.xpose.msra.mxu0 0.0
        %1212 = vmatprep.subr.mxu0 0.0
        %1213 = vmatpush1.xpose.msra.mxu0 0.0
        %1214 = vmatprep.subr.mxu0 0.0
        %1215 = vmatpush1.xpose.msra.mxu0 0.0
        %1216 = vmatprep.subr.mxu0 0.0
        %1217 = vmatpush1.xpose.msra.mxu0 0.0
        %1218 = vmatprep.subr.mxu0 0.0
        %1219 = vmatpush1.xpose.msra.mxu0 0.0
        %1220 = vmatprep.subr.mxu0 0.0
        %1221 = vmatpush1.xpose.msra.mxu0 0.0
        %1222 = vmatprep.subr.mxu0 0.0
        %1223 = vmatpush1.xpose.msra.mxu0 0.0
        %1224 = vmatprep.subr.mxu0 0.0
        %1225 = vmatpush1.xpose.msra.mxu0 0.0
        %1226 = vmatprep.subr.mxu0 0.0
        %1227 = vmatpush1.xpose.msra.mxu0 0.0
        %1228 = vmatprep.subr.mxu0 0.0
        %1229 = vmatpush1.xpose.msra.mxu0 0.0
        %1230 = vmatprep.subr.mxu0 0.0
        %1231 = vmatpush1.xpose.msra.mxu0 0.0
        %1232 = vmatprep.subr.mxu0 0.0
        %1233 = vmatpush1.xpose.msra.mxu0 0.0
        %1234 = vmatprep.subr.mxu0 0.0
        %1235 = vmatpush1.xpose.msra.mxu0 0.0
        %1236 = vmatprep.subr.mxu0 0.0
        %1237 = vmatpush1.xpose.msra.mxu0 0.0
        %1238 = vmatprep.subr.mxu0 0.0
        %1239 = vmatpush1.xpose.msra.mxu0 0.0
        %1240 = vmatprep.subr.mxu0 0.0
        %1241 = vmatpush1.xpose.msra.mxu0 0.0
        %1242 = vmatprep.subr.mxu0 0.0
        %1243 = vmatpush1.xpose.msra.mxu0 0.0
        %1244 = vmatprep.subr.mxu0 0.0
        %1245 = vmatpush1.xpose.msra.mxu0 0.0
        %1246 = vmatprep.subr.mxu0 0.0
        %1247 = vmatpush1.xpose.msra.mxu0 0.0
        %1248 = vmatprep.subr.mxu0 0.0
        %1249 = vmatpush1.xpose.msra.mxu0 0.0
        %1250 = vmatprep.subr.mxu0 0.0
        %1251 = vmatpush1.xpose.msra.mxu0 0.0
        %1252 = vmatprep.mubr.f32.mxu0 0.0
        %1253 = vmatmul.mubr.f32.gmra.mrb[0].mxu0 %v1180
        %v1254 = vpop.f32.mrb[0].mxu0
        %v1255 = vadd.f32 0.0, %v1254
        %v1256 = vpop.f32.mrb[0].mxu0
        %1257 = vdwg.mxu0
        %v1259 = vsel %vm352, %v1174, 0
        %v1262 = vsel %vm352, %v1172, 0
        %v1265 = vsel %vm352, %v1173, 0
        %1267 = vmatprep.subr.mxu0 0.0
        %1268 = vmatpush1.xpose.msra.mxu0 %v1262
        %1269 = vmatprep.subr.mxu0 0.0
        %1270 = vmatpush1.xpose.msra.mxu0 %v1265
        %1271 = vmatprep.subr.mxu0 0.0
        %1272 = vmatpush1.xpose.msra.mxu0 0.0
        %1273 = vmatprep.subr.mxu0 0.0
        %1274 = vmatpush1.xpose.msra.mxu0 0.0
        %1275 = vmatprep.subr.mxu0 0.0
        %1276 = vmatpush1.xpose.msra.mxu0 0.0
        %1277 = vmatprep.subr.mxu0 0.0
        %1278 = vmatpush1.xpose.msra.mxu0 0.0
        %1279 = vmatprep.subr.mxu0 0.0
        %1280 = vmatpush1.xpose.msra.mxu0 0.0
        %1281 = vmatprep.subr.mxu0 0.0
        %1282 = vmatpush1.xpose.msra.mxu0 0.0
        %1283 = vmatprep.subr.mxu0 0.0
        %1284 = vmatpush1.xpose.msra.mxu0 0.0
        %1285 = vmatprep.subr.mxu0 0.0
        %1286 = vmatpush1.xpose.msra.mxu0 0.0
        %1287 = vmatprep.subr.mxu0 0.0
        %1288 = vmatpush1.xpose.msra.mxu0 0.0
        %1289 = vmatprep.subr.mxu0 0.0
        %1290 = vmatpush1.xpose.msra.mxu0 0.0
        %1291 = vmatprep.subr.mxu0 0.0
        %1292 = vmatpush1.xpose.msra.mxu0 0.0
        %1293 = vmatprep.subr.mxu0 0.0
        %1294 = vmatpush1.xpose.msra.mxu0 0.0
        %1295 = vmatprep.subr.mxu0 0.0
        %1296 = vmatpush1.xpose.msra.mxu0 0.0
        %1297 = vmatprep.subr.mxu0 0.0
        %1298 = vmatpush1.xpose.msra.mxu0 0.0
        %1299 = vmatprep.subr.mxu0 0.0
        %1300 = vmatpush1.xpose.msra.mxu0 0.0
        %1301 = vmatprep.subr.mxu0 0.0
        %1302 = vmatpush1.xpose.msra.mxu0 0.0
        %1303 = vmatprep.subr.mxu0 0.0
        %1304 = vmatpush1.xpose.msra.mxu0 0.0
        %1305 = vmatprep.subr.mxu0 0.0
        %1306 = vmatpush1.xpose.msra.mxu0 0.0
        %1307 = vmatprep.subr.mxu0 0.0
        %1308 = vmatpush1.xpose.msra.mxu0 0.0
        %1309 = vmatprep.subr.mxu0 0.0
        %1310 = vmatpush1.xpose.msra.mxu0 0.0
        %1311 = vmatprep.subr.mxu0 0.0
        %1312 = vmatpush1.xpose.msra.mxu0 0.0
        %1313 = vmatprep.subr.mxu0 0.0
        %1314 = vmatpush1.xpose.msra.mxu0 0.0
        %1315 = vmatprep.subr.mxu0 0.0
        %1316 = vmatpush1.xpose.msra.mxu0 0.0
        %1317 = vmatprep.subr.mxu0 0.0
        %1318 = vmatpush1.xpose.msra.mxu0 0.0
        %1319 = vmatprep.subr.mxu0 0.0
        %1320 = vmatpush1.xpose.msra.mxu0 0.0
        %1321 = vmatprep.subr.mxu0 0.0
        %1322 = vmatpush1.xpose.msra.mxu0 0.0
        %1323 = vmatprep.subr.mxu0 0.0
        %1324 = vmatpush1.xpose.msra.mxu0 0.0
        %1325 = vmatprep.subr.mxu0 0.0
        %1326 = vmatpush1.xpose.msra.mxu0 0.0
        %1327 = vmatprep.subr.mxu0 0.0
        %1328 = vmatpush1.xpose.msra.mxu0 0.0
        %1329 = vmatprep.subr.mxu0 0.0
        %1330 = vmatpush1.xpose.msra.mxu0 0.0
        %1331 = vmatprep.mubr.f32.mxu0 0.0
        %1332 = vmatmul.mubr.f32.gmra.mrb[0].mxu0 %v1259
        %v1333 = vpop.f32.mrb[0].mxu0
        %v1334 = vadd.f32 %v1255, %v1333
        %v1335 = vpop.f32.mrb[0].mxu0
        %1336 = vdwg.mxu0
        %v1337 = vld [vmem:[#allocation2 + $0x2] sm:$0xff]
        %v1338 = vld [vmem:[#allocation2 + $0xa] sm:$0xff]
        %v1339 = vmul.f32 %v1337, %v341
        %v1340 = vmul.f32 %v1338, %v342
        %s1341 = scalar_lea.vmem %s5, 8
        %v1342 = vld [vmem:[%s1341] sm:$0xf]
        %v1344 = vsel %vm352, %v1342, 0
        %v1347 = vsel %vm352, %v1339, 0
        %v1350 = vsel %vm352, %v1340, 0
        %1352 = vmatprep.subr.mxu0 0.0
        %1353 = vmatpush1.xpose.msra.mxu0 %v1347
        %1354 = vmatprep.subr.mxu0 0.0
        %1355 = vmatpush1.xpose.msra.mxu0 %v1350
        %1356 = vmatprep.subr.mxu0 0.0
        %1357 = vmatpush1.xpose.msra.mxu0 0.0
        %1358 = vmatprep.subr.mxu0 0.0
        %1359 = vmatpush1.xpose.msra.mxu0 0.0
        %1360 = vmatprep.subr.mxu0 0.0
        %1361 = vmatpush1.xpose.msra.mxu0 0.0
        %1362 = vmatprep.subr.mxu0 0.0
        %1363 = vmatpush1.xpose.msra.mxu0 0.0
        %1364 = vmatprep.subr.mxu0 0.0
        %1365 = vmatpush1.xpose.msra.mxu0 0.0
        %1366 = vmatprep.subr.mxu0 0.0
        %1367 = vmatpush1.xpose.msra.mxu0 0.0
        %1368 = vmatprep.subr.mxu0 0.0
        %1369 = vmatpush1.xpose.msra.mxu0 0.0
        %1370 = vmatprep.subr.mxu0 0.0
        %1371 = vmatpush1.xpose.msra.mxu0 0.0
        %1372 = vmatprep.subr.mxu0 0.0
        %1373 = vmatpush1.xpose.msra.mxu0 0.0
        %1374 = vmatprep.subr.mxu0 0.0
        %1375 = vmatpush1.xpose.msra.mxu0 0.0
        %1376 = vmatprep.subr.mxu0 0.0
        %1377 = vmatpush1.xpose.msra.mxu0 0.0
        %1378 = vmatprep.subr.mxu0 0.0
        %1379 = vmatpush1.xpose.msra.mxu0 0.0
        %1380 = vmatprep.subr.mxu0 0.0
        %1381 = vmatpush1.xpose.msra.mxu0 0.0
        %1382 = vmatprep.subr.mxu0 0.0
        %1383 = vmatpush1.xpose.msra.mxu0 0.0
        %1384 = vmatprep.subr.mxu0 0.0
        %1385 = vmatpush1.xpose.msra.mxu0 0.0
        %1386 = vmatprep.subr.mxu0 0.0
        %1387 = vmatpush1.xpose.msra.mxu0 0.0
        %1388 = vmatprep.subr.mxu0 0.0
        %1389 = vmatpush1.xpose.msra.mxu0 0.0
        %1390 = vmatprep.subr.mxu0 0.0
        %1391 = vmatpush1.xpose.msra.mxu0 0.0
        %1392 = vmatprep.subr.mxu0 0.0
        %1393 = vmatpush1.xpose.msra.mxu0 0.0
        %1394 = vmatprep.subr.mxu0 0.0
        %1395 = vmatpush1.xpose.msra.mxu0 0.0
        %1396 = vmatprep.subr.mxu0 0.0
        %1397 = vmatpush1.xpose.msra.mxu0 0.0
        %1398 = vmatprep.subr.mxu0 0.0
        %1399 = vmatpush1.xpose.msra.mxu0 0.0
        %1400 = vmatprep.subr.mxu0 0.0
        %1401 = vmatpush1.xpose.msra.mxu0 0.0
        %1402 = vmatprep.subr.mxu0 0.0
        %1403 = vmatpush1.xpose.msra.mxu0 0.0
        %1404 = vmatprep.subr.mxu0 0.0
        %1405 = vmatpush1.xpose.msra.mxu0 0.0
        %1406 = vmatprep.subr.mxu0 0.0
        %1407 = vmatpush1.xpose.msra.mxu0 0.0
        %1408 = vmatprep.subr.mxu0 0.0
        %1409 = vmatpush1.xpose.msra.mxu0 0.0
        %1410 = vmatprep.subr.mxu0 0.0
        %1411 = vmatpush1.xpose.msra.mxu0 0.0
        %1412 = vmatprep.subr.mxu0 0.0
        %1413 = vmatpush1.xpose.msra.mxu0 0.0
        %1414 = vmatprep.subr.mxu0 0.0
        %1415 = vmatpush1.xpose.msra.mxu0 0.0
        %1416 = vmatprep.mubr.f32.mxu0 0.0
        %1417 = vmatmul.mubr.f32.gmra.mrb[0].mxu0 %v1344
        %v1418 = vpop.f32.mrb[0].mxu0
        %v1419 = vadd.f32 0.0, %v1418
        %v1420 = vpop.f32.mrb[0].mxu0
        %1421 = vdwg.mxu0
        %v1422 = vadd.f32 %v1334, %v1419
        %v1423 = vld [vmem:[#allocation2 + $0x4] sm:$0xff]
        %v1424 = vld [vmem:[#allocation2 + $0xc] sm:$0xff]
        %v1425 = vmul.f32 %v1423, %v335
        %v1426 = vmul.f32 %v1424, %v336
        %s1427 = scalar_lea.vmem %s5, 12
        %v1428 = vld [vmem:[%s1427] sm:$0xf]
        %v1430 = vsel %vm352, %v1428, 0
        %v1433 = vsel %vm352, %v1425, 0
        %v1436 = vsel %vm352, %v1426, 0
        %1438 = vmatprep.subr.mxu0 0.0
        %1439 = vmatpush1.xpose.msra.mxu0 %v1433
        %1440 = vmatprep.subr.mxu0 0.0
        %1441 = vmatpush1.xpose.msra.mxu0 %v1436
        %1442 = vmatprep.subr.mxu0 0.0
        %1443 = vmatpush1.xpose.msra.mxu0 0.0
        %1444 = vmatprep.subr.mxu0 0.0
        %1445 = vmatpush1.xpose.msra.mxu0 0.0
        %1446 = vmatprep.subr.mxu0 0.0
        %1447 = vmatpush1.xpose.msra.mxu0 0.0
        %1448 = vmatprep.subr.mxu0 0.0
        %1449 = vmatpush1.xpose.msra.mxu0 0.0
        %1450 = vmatprep.subr.mxu0 0.0
        %1451 = vmatpush1.xpose.msra.mxu0 0.0
        %1452 = vmatprep.subr.mxu0 0.0
        %1453 = vmatpush1.xpose.msra.mxu0 0.0
        %1454 = vmatprep.subr.mxu0 0.0
        %1455 = vmatpush1.xpose.msra.mxu0 0.0
        %1456 = vmatprep.subr.mxu0 0.0
        %1457 = vmatpush1.xpose.msra.mxu0 0.0
        %1458 = vmatprep.subr.mxu0 0.0
        %1459 = vmatpush1.xpose.msra.mxu0 0.0
        %1460 = vmatprep.subr.mxu0 0.0
        %1461 = vmatpush1.xpose.msra.mxu0 0.0
        %1462 = vmatprep.subr.mxu0 0.0
        %1463 = vmatpush1.xpose.msra.mxu0 0.0
        %1464 = vmatprep.subr.mxu0 0.0
        %1465 = vmatpush1.xpose.msra.mxu0 0.0
        %1466 = vmatprep.subr.mxu0 0.0
        %1467 = vmatpush1.xpose.msra.mxu0 0.0
        %1468 = vmatprep.subr.mxu0 0.0
        %1469 = vmatpush1.xpose.msra.mxu0 0.0
        %1470 = vmatprep.subr.mxu0 0.0
        %1471 = vmatpush1.xpose.msra.mxu0 0.0
        %1472 = vmatprep.subr.mxu0 0.0
        %1473 = vmatpush1.xpose.msra.mxu0 0.0
        %1474 = vmatprep.subr.mxu0 0.0
        %1475 = vmatpush1.xpose.msra.mxu0 0.0
        %1476 = vmatprep.subr.mxu0 0.0
        %1477 = vmatpush1.xpose.msra.mxu0 0.0
        %1478 = vmatprep.subr.mxu0 0.0
        %1479 = vmatpush1.xpose.msra.mxu0 0.0
        %1480 = vmatprep.subr.mxu0 0.0
        %1481 = vmatpush1.xpose.msra.mxu0 0.0
        %1482 = vmatprep.subr.mxu0 0.0
        %1483 = vmatpush1.xpose.msra.mxu0 0.0
        %1484 = vmatprep.subr.mxu0 0.0
        %1485 = vmatpush1.xpose.msra.mxu0 0.0
        %1486 = vmatprep.subr.mxu0 0.0
        %1487 = vmatpush1.xpose.msra.mxu0 0.0
        %1488 = vmatprep.subr.mxu0 0.0
        %1489 = vmatpush1.xpose.msra.mxu0 0.0
        %1490 = vmatprep.subr.mxu0 0.0
        %1491 = vmatpush1.xpose.msra.mxu0 0.0
        %1492 = vmatprep.subr.mxu0 0.0
        %1493 = vmatpush1.xpose.msra.mxu0 0.0
        %1494 = vmatprep.subr.mxu0 0.0
        %1495 = vmatpush1.xpose.msra.mxu0 0.0
        %1496 = vmatprep.subr.mxu0 0.0
        %1497 = vmatpush1.xpose.msra.mxu0 0.0
        %1498 = vmatprep.subr.mxu0 0.0
        %1499 = vmatpush1.xpose.msra.mxu0 0.0
        %1500 = vmatprep.subr.mxu0 0.0
        %1501 = vmatpush1.xpose.msra.mxu0 0.0
        %1502 = vmatprep.mubr.f32.mxu0 0.0
        %1503 = vmatmul.mubr.f32.gmra.mrb[0].mxu0 %v1430
        %v1504 = vpop.f32.mrb[0].mxu0
        %v1505 = vadd.f32 0.0, %v1504
        %v1506 = vpop.f32.mrb[0].mxu0
        %1507 = vdwg.mxu0
        %v1508 = vadd.f32 %v1422, %v1505
        %v1509 = vld [vmem:[#allocation2 + $0x5] sm:$0xff]
        %v1510 = vld [vmem:[#allocation2 + $0xd] sm:$0xff]
        %s1511 = scalar_lea.vmem %s5, 16
        %v1512 = vld [vmem:[%s1511] sm:$0xf]
        %v1514 = vsel %vm352, %v1512, 0
        %v1517 = vsel %vm352, %v1509, 0
        %v1520 = vsel %vm352, %v1510, 0
        %1522 = vmatprep.subr.mxu0 0.0
        %1523 = vmatpush1.xpose.msra.mxu0 %v1517
        %1524 = vmatprep.subr.mxu0 0.0
        %1525 = vmatpush1.xpose.msra.mxu0 %v1520
        %1526 = vmatprep.subr.mxu0 0.0
        %1527 = vmatpush1.xpose.msra.mxu0 0.0
        %1528 = vmatprep.subr.mxu0 0.0
        %1529 = vmatpush1.xpose.msra.mxu0 0.0
        %1530 = vmatprep.subr.mxu0 0.0
        %1531 = vmatpush1.xpose.msra.mxu0 0.0
        %1532 = vmatprep.subr.mxu0 0.0
        %1533 = vmatpush1.xpose.msra.mxu0 0.0
        %1534 = vmatprep.subr.mxu0 0.0
        %1535 = vmatpush1.xpose.msra.mxu0 0.0
        %1536 = vmatprep.subr.mxu0 0.0
        %1537 = vmatpush1.xpose.msra.mxu0 0.0
        %1538 = vmatprep.subr.mxu0 0.0
        %1539 = vmatpush1.xpose.msra.mxu0 0.0
        %1540 = vmatprep.subr.mxu0 0.0
        %1541 = vmatpush1.xpose.msra.mxu0 0.0
        %1542 = vmatprep.subr.mxu0 0.0
        %1543 = vmatpush1.xpose.msra.mxu0 0.0
        %1544 = vmatprep.subr.mxu0 0.0
        %1545 = vmatpush1.xpose.msra.mxu0 0.0
        %1546 = vmatprep.subr.mxu0 0.0
        %1547 = vmatpush1.xpose.msra.mxu0 0.0
        %1548 = vmatprep.subr.mxu0 0.0
        %1549 = vmatpush1.xpose.msra.mxu0 0.0
        %1550 = vmatprep.subr.mxu0 0.0
        %1551 = vmatpush1.xpose.msra.mxu0 0.0
        %1552 = vmatprep.subr.mxu0 0.0
        %1553 = vmatpush1.xpose.msra.mxu0 0.0
        %1554 = vmatprep.subr.mxu0 0.0
        %1555 = vmatpush1.xpose.msra.mxu0 0.0
        %1556 = vmatprep.subr.mxu0 0.0
        %1557 = vmatpush1.xpose.msra.mxu0 0.0
        %1558 = vmatprep.subr.mxu0 0.0
        %1559 = vmatpush1.xpose.msra.mxu0 0.0
        %1560 = vmatprep.subr.mxu0 0.0
        %1561 = vmatpush1.xpose.msra.mxu0 0.0
        %1562 = vmatprep.subr.mxu0 0.0
        %1563 = vmatpush1.xpose.msra.mxu0 0.0
        %1564 = vmatprep.subr.mxu0 0.0
        %1565 = vmatpush1.xpose.msra.mxu0 0.0
        %1566 = vmatprep.subr.mxu0 0.0
        %1567 = vmatpush1.xpose.msra.mxu0 0.0
        %1568 = vmatprep.subr.mxu0 0.0
        %1569 = vmatpush1.xpose.msra.mxu0 0.0
        %1570 = vmatprep.subr.mxu0 0.0
        %1571 = vmatpush1.xpose.msra.mxu0 0.0
        %1572 = vmatprep.subr.mxu0 0.0
        %1573 = vmatpush1.xpose.msra.mxu0 0.0
        %1574 = vmatprep.subr.mxu0 0.0
        %1575 = vmatpush1.xpose.msra.mxu0 0.0
        %1576 = vmatprep.subr.mxu0 0.0
        %1577 = vmatpush1.xpose.msra.mxu0 0.0
        %1578 = vmatprep.subr.mxu0 0.0
        %1579 = vmatpush1.xpose.msra.mxu0 0.0
        %1580 = vmatprep.subr.mxu0 0.0
        %1581 = vmatpush1.xpose.msra.mxu0 0.0
        %1582 = vmatprep.subr.mxu0 0.0
        %1583 = vmatpush1.xpose.msra.mxu0 0.0
        %1584 = vmatprep.subr.mxu0 0.0
        %1585 = vmatpush1.xpose.msra.mxu0 0.0
        %1586 = vmatprep.mubr.f32.mxu0 0.0
        %1587 = vmatmul.mubr.f32.gmra.mrb[0].mxu0 %v1514
        %v1588 = vpop.f32.mrb[0].mxu0
        %v1589 = vadd.f32 0.0, %v1588
        %v1590 = vpop.f32.mrb[0].mxu0
        %1591 = vdwg.mxu0
        %v1592 = vadd.f32 %v1508, %v1589
        %v1593 = vld [vmem:[#allocation2 + $0x6] sm:$0xff]
        %v1594 = vld [vmem:[#allocation2 + $0xe] sm:$0xff]
        %v1595 = vmul.f32 %v1593, %v341
        %v1596 = vmul.f32 %v1594, %v342
        %s1597 = scalar_lea.vmem %s5, 20
        %v1598 = vld [vmem:[%s1597] sm:$0xf]
        %v1600 = vsel %vm352, %v1598, 0
        %v1603 = vsel %vm352, %v1595, 0
        %v1606 = vsel %vm352, %v1596, 0
        %1608 = vmatprep.subr.mxu0 0.0
        %1609 = vmatpush1.xpose.msra.mxu0 %v1603
        %1610 = vmatprep.subr.mxu0 0.0
        %1611 = vmatpush1.xpose.msra.mxu0 %v1606
        %1612 = vmatprep.subr.mxu0 0.0
        %1613 = vmatpush1.xpose.msra.mxu0 0.0
        %1614 = vmatprep.subr.mxu0 0.0
        %1615 = vmatpush1.xpose.msra.mxu0 0.0
        %1616 = vmatprep.subr.mxu0 0.0
        %1617 = vmatpush1.xpose.msra.mxu0 0.0
        %1618 = vmatprep.subr.mxu0 0.0
        %1619 = vmatpush1.xpose.msra.mxu0 0.0
        %1620 = vmatprep.subr.mxu0 0.0
        %1621 = vmatpush1.xpose.msra.mxu0 0.0
        %1622 = vmatprep.subr.mxu0 0.0
        %1623 = vmatpush1.xpose.msra.mxu0 0.0
        %1624 = vmatprep.subr.mxu0 0.0
        %1625 = vmatpush1.xpose.msra.mxu0 0.0
        %1626 = vmatprep.subr.mxu0 0.0
        %1627 = vmatpush1.xpose.msra.mxu0 0.0
        %1628 = vmatprep.subr.mxu0 0.0
        %1629 = vmatpush1.xpose.msra.mxu0 0.0
        %1630 = vmatprep.subr.mxu0 0.0
        %1631 = vmatpush1.xpose.msra.mxu0 0.0
        %1632 = vmatprep.subr.mxu0 0.0
        %1633 = vmatpush1.xpose.msra.mxu0 0.0
        %1634 = vmatprep.subr.mxu0 0.0
        %1635 = vmatpush1.xpose.msra.mxu0 0.0
        %1636 = vmatprep.subr.mxu0 0.0
        %1637 = vmatpush1.xpose.msra.mxu0 0.0
        %1638 = vmatprep.subr.mxu0 0.0
        %1639 = vmatpush1.xpose.msra.mxu0 0.0
        %1640 = vmatprep.subr.mxu0 0.0
        %1641 = vmatpush1.xpose.msra.mxu0 0.0
        %1642 = vmatprep.subr.mxu0 0.0
        %1643 = vmatpush1.xpose.msra.mxu0 0.0
        %1644 = vmatprep.subr.mxu0 0.0
        %1645 = vmatpush1.xpose.msra.mxu0 0.0
        %1646 = vmatprep.subr.mxu0 0.0
        %1647 = vmatpush1.xpose.msra.mxu0 0.0
        %1648 = vmatprep.subr.mxu0 0.0
        %1649 = vmatpush1.xpose.msra.mxu0 0.0
        %1650 = vmatprep.subr.mxu0 0.0
        %1651 = vmatpush1.xpose.msra.mxu0 0.0
        %1652 = vmatprep.subr.mxu0 0.0
        %1653 = vmatpush1.xpose.msra.mxu0 0.0
        %1654 = vmatprep.subr.mxu0 0.0
        %1655 = vmatpush1.xpose.msra.mxu0 0.0
        %1656 = vmatprep.subr.mxu0 0.0
        %1657 = vmatpush1.xpose.msra.mxu0 0.0
        %1658 = vmatprep.subr.mxu0 0.0
        %1659 = vmatpush1.xpose.msra.mxu0 0.0
        %1660 = vmatprep.subr.mxu0 0.0
        %1661 = vmatpush1.xpose.msra.mxu0 0.0
        %1662 = vmatprep.subr.mxu0 0.0
        %1663 = vmatpush1.xpose.msra.mxu0 0.0
        %1664 = vmatprep.subr.mxu0 0.0
        %1665 = vmatpush1.xpose.msra.mxu0 0.0
        %1666 = vmatprep.subr.mxu0 0.0
        %1667 = vmatpush1.xpose.msra.mxu0 0.0
        %1668 = vmatprep.subr.mxu0 0.0
        %1669 = vmatpush1.xpose.msra.mxu0 0.0
        %1670 = vmatprep.subr.mxu0 0.0
        %1671 = vmatpush1.xpose.msra.mxu0 0.0
        %1672 = vmatprep.mubr.f32.mxu0 0.0
        %1673 = vmatmul.mubr.f32.gmra.mrb[0].mxu0 %v1600
        %v1674 = vpop.f32.mrb[0].mxu0
        %v1675 = vadd.f32 0.0, %v1674
        %v1676 = vpop.f32.mrb[0].mxu0
        %1677 = vdwg.mxu0
        %v1678 = vadd.f32 %v1592, %v1675
        %v1679 = vld [vmem:[#allocation2 + $0x8] sm:$0xff]
        %v1680 = vld [vmem:[#allocation2 + $0x10] sm:$0xff]
        %v1681 = vmul.f32 %v1679, %v335
        %v1682 = vmul.f32 %v1680, %v336
        %s1683 = scalar_lea.vmem %s5, 24
        %v1684 = vld [vmem:[%s1683] sm:$0xf]
        %v1686 = vsel %vm352, %v1684, 0
        %v1689 = vsel %vm352, %v1681, 0
        %v1692 = vsel %vm352, %v1682, 0
        %1694 = vmatprep.subr.mxu0 0.0
        %1695 = vmatpush1.xpose.msra.mxu0 %v1689
        %1696 = vmatprep.subr.mxu0 0.0
        %1697 = vmatpush1.xpose.msra.mxu0 %v1692
        %1698 = vmatprep.subr.mxu0 0.0
        %1699 = vmatpush1.xpose.msra.mxu0 0.0
        %1700 = vmatprep.subr.mxu0 0.0
        %1701 = vmatpush1.xpose.msra.mxu0 0.0
        %1702 = vmatprep.subr.mxu0 0.0
        %1703 = vmatpush1.xpose.msra.mxu0 0.0
        %1704 = vmatprep.subr.mxu0 0.0
        %1705 = vmatpush1.xpose.msra.mxu0 0.0
        %1706 = vmatprep.subr.mxu0 0.0
        %1707 = vmatpush1.xpose.msra.mxu0 0.0
        %1708 = vmatprep.subr.mxu0 0.0
        %1709 = vmatpush1.xpose.msra.mxu0 0.0
        %1710 = vmatprep.subr.mxu0 0.0
        %1711 = vmatpush1.xpose.msra.mxu0 0.0
        %1712 = vmatprep.subr.mxu0 0.0
        %1713 = vmatpush1.xpose.msra.mxu0 0.0
        %1714 = vmatprep.subr.mxu0 0.0
        %1715 = vmatpush1.xpose.msra.mxu0 0.0
        %1716 = vmatprep.subr.mxu0 0.0
        %1717 = vmatpush1.xpose.msra.mxu0 0.0
        %1718 = vmatprep.subr.mxu0 0.0
        %1719 = vmatpush1.xpose.msra.mxu0 0.0
        %1720 = vmatprep.subr.mxu0 0.0
        %1721 = vmatpush1.xpose.msra.mxu0 0.0
        %1722 = vmatprep.subr.mxu0 0.0
        %1723 = vmatpush1.xpose.msra.mxu0 0.0
        %1724 = vmatprep.subr.mxu0 0.0
        %1725 = vmatpush1.xpose.msra.mxu0 0.0
        %1726 = vmatprep.subr.mxu0 0.0
        %1727 = vmatpush1.xpose.msra.mxu0 0.0
        %1728 = vmatprep.subr.mxu0 0.0
        %1729 = vmatpush1.xpose.msra.mxu0 0.0
        %1730 = vmatprep.subr.mxu0 0.0
        %1731 = vmatpush1.xpose.msra.mxu0 0.0
        %1732 = vmatprep.subr.mxu0 0.0
        %1733 = vmatpush1.xpose.msra.mxu0 0.0
        %1734 = vmatprep.subr.mxu0 0.0
        %1735 = vmatpush1.xpose.msra.mxu0 0.0
        %1736 = vmatprep.subr.mxu0 0.0
        %1737 = vmatpush1.xpose.msra.mxu0 0.0
        %1738 = vmatprep.subr.mxu0 0.0
        %1739 = vmatpush1.xpose.msra.mxu0 0.0
        %1740 = vmatprep.subr.mxu0 0.0
        %1741 = vmatpush1.xpose.msra.mxu0 0.0
        %1742 = vmatprep.subr.mxu0 0.0
        %1743 = vmatpush1.xpose.msra.mxu0 0.0
        %1744 = vmatprep.subr.mxu0 0.0
        %1745 = vmatpush1.xpose.msra.mxu0 0.0
        %1746 = vmatprep.subr.mxu0 0.0
        %1747 = vmatpush1.xpose.msra.mxu0 0.0
        %1748 = vmatprep.subr.mxu0 0.0
        %1749 = vmatpush1.xpose.msra.mxu0 0.0
        %1750 = vmatprep.subr.mxu0 0.0
        %1751 = vmatpush1.xpose.msra.mxu0 0.0
        %1752 = vmatprep.subr.mxu0 0.0
        %1753 = vmatpush1.xpose.msra.mxu0 0.0
        %1754 = vmatprep.subr.mxu0 0.0
        %1755 = vmatpush1.xpose.msra.mxu0 0.0
        %1756 = vmatprep.subr.mxu0 0.0
        %1757 = vmatpush1.xpose.msra.mxu0 0.0
        %1758 = vmatprep.mubr.f32.mxu0 0.0
        %1759 = vmatmul.mubr.f32.gmra.mrb[0].mxu0 %v1686
        %v1760 = vpop.f32.mrb[0].mxu0
        %v1761 = vadd.f32 0.0, %v1760
        %v1762 = vpop.f32.mrb[0].mxu0
        %1763 = vdwg.mxu0
        %v1764 = vadd.f32 %v1678, %v1761
        %v1765 = vld [vmem:[#allocation2 + $0x9] sm:$0xff]
        %v1766 = vld [vmem:[#allocation2 + $0x11] sm:$0xff]
        %s1767 = scalar_lea.vmem %s5, 28
        %v1768 = vld [vmem:[%s1767] sm:$0xf]
        %v1770 = vsel %vm352, %v1768, 0
        %v1773 = vsel %vm352, %v1765, 0
        %v1776 = vsel %vm352, %v1766, 0
        %1778 = vmatprep.subr.mxu0 0.0
        %1779 = vmatpush1.xpose.msra.mxu0 %v1773
        %1780 = vmatprep.subr.mxu0 0.0
        %1781 = vmatpush1.xpose.msra.mxu0 %v1776
        %1782 = vmatprep.subr.mxu0 0.0
        %1783 = vmatpush1.xpose.msra.mxu0 0.0
        %1784 = vmatprep.subr.mxu0 0.0
        %1785 = vmatpush1.xpose.msra.mxu0 0.0
        %1786 = vmatprep.subr.mxu0 0.0
        %1787 = vmatpush1.xpose.msra.mxu0 0.0
        %1788 = vmatprep.subr.mxu0 0.0
        %1789 = vmatpush1.xpose.msra.mxu0 0.0
        %1790 = vmatprep.subr.mxu0 0.0
        %1791 = vmatpush1.xpose.msra.mxu0 0.0
        %1792 = vmatprep.subr.mxu0 0.0
        %1793 = vmatpush1.xpose.msra.mxu0 0.0
        %1794 = vmatprep.subr.mxu0 0.0
        %1795 = vmatpush1.xpose.msra.mxu0 0.0
        %1796 = vmatprep.subr.mxu0 0.0
        %1797 = vmatpush1.xpose.msra.mxu0 0.0
        %1798 = vmatprep.subr.mxu0 0.0
        %1799 = vmatpush1.xpose.msra.mxu0 0.0
        %1800 = vmatprep.subr.mxu0 0.0
        %1801 = vmatpush1.xpose.msra.mxu0 0.0
        %1802 = vmatprep.subr.mxu0 0.0
        %1803 = vmatpush1.xpose.msra.mxu0 0.0
        %1804 = vmatprep.subr.mxu0 0.0
        %1805 = vmatpush1.xpose.msra.mxu0 0.0
        %1806 = vmatprep.subr.mxu0 0.0
        %1807 = vmatpush1.xpose.msra.mxu0 0.0
        %1808 = vmatprep.subr.mxu0 0.0
        %1809 = vmatpush1.xpose.msra.mxu0 0.0
        %1810 = vmatprep.subr.mxu0 0.0
        %1811 = vmatpush1.xpose.msra.mxu0 0.0
        %1812 = vmatprep.subr.mxu0 0.0
        %1813 = vmatpush1.xpose.msra.mxu0 0.0
        %1814 = vmatprep.subr.mxu0 0.0
        %1815 = vmatpush1.xpose.msra.mxu0 0.0
        %1816 = vmatprep.subr.mxu0 0.0
        %1817 = vmatpush1.xpose.msra.mxu0 0.0
        %1818 = vmatprep.subr.mxu0 0.0
        %1819 = vmatpush1.xpose.msra.mxu0 0.0
        %1820 = vmatprep.subr.mxu0 0.0
        %1821 = vmatpush1.xpose.msra.mxu0 0.0
        %1822 = vmatprep.subr.mxu0 0.0
        %1823 = vmatpush1.xpose.msra.mxu0 0.0
        %1824 = vmatprep.subr.mxu0 0.0
        %1825 = vmatpush1.xpose.msra.mxu0 0.0
        %1826 = vmatprep.subr.mxu0 0.0
        %1827 = vmatpush1.xpose.msra.mxu0 0.0
        %1828 = vmatprep.subr.mxu0 0.0
        %1829 = vmatpush1.xpose.msra.mxu0 0.0
        %1830 = vmatprep.subr.mxu0 0.0
        %1831 = vmatpush1.xpose.msra.mxu0 0.0
        %1832 = vmatprep.subr.mxu0 0.0
        %1833 = vmatpush1.xpose.msra.mxu0 0.0
        %1834 = vmatprep.subr.mxu0 0.0
        %1835 = vmatpush1.xpose.msra.mxu0 0.0
        %1836 = vmatprep.subr.mxu0 0.0
        %1837 = vmatpush1.xpose.msra.mxu0 0.0
        %1838 = vmatprep.subr.mxu0 0.0
        %1839 = vmatpush1.xpose.msra.mxu0 0.0
        %1840 = vmatprep.subr.mxu0 0.0
        %1841 = vmatpush1.xpose.msra.mxu0 0.0
        %1842 = vmatprep.mubr.f32.mxu0 0.0
        %1843 = vmatmul.mubr.f32.gmra.mrb[0].mxu0 %v1770
        %v1844 = vpop.f32.mrb[0].mxu0
        %v1845 = vadd.f32 0.0, %v1844
        %v1846 = vpop.f32.mrb[0].mxu0
        %1847 = vdwg.mxu0
        %v1848 = vadd.f32 %v1764, %v1845
        %v1849 = vld [vmem:[#allocation2 + $0xa] sm:$0xff]
        %v1850 = vld [vmem:[#allocation2 + $0x12] sm:$0xff]
        %v1851 = vmul.f32 %v1849, %v341
        %v1852 = vmul.f32 %v1850, %v342
        %s1853 = scalar_lea.vmem %s5, 32
        %v1854 = vld [vmem:[%s1853] sm:$0xf]
        %v1856 = vsel %vm352, %v1854, 0
        %v1859 = vsel %vm352, %v1851, 0
        %v1862 = vsel %vm352, %v1852, 0
        %1864 = vmatprep.subr.mxu0 0.0
        %1865 = vmatpush1.xpose.msra.mxu0 %v1859
        %1866 = vmatprep.subr.mxu0 0.0
        %1867 = vmatpush1.xpose.msra.mxu0 %v1862
        %1868 = vmatprep.subr.mxu0 0.0
        %1869 = vmatpush1.xpose.msra.mxu0 0.0
        %1870 = vmatprep.subr.mxu0 0.0
        %1871 = vmatpush1.xpose.msra.mxu0 0.0
        %1872 = vmatprep.subr.mxu0 0.0
        %1873 = vmatpush1.xpose.msra.mxu0 0.0
        %1874 = vmatprep.subr.mxu0 0.0
        %1875 = vmatpush1.xpose.msra.mxu0 0.0
        %1876 = vmatprep.subr.mxu0 0.0
        %1877 = vmatpush1.xpose.msra.mxu0 0.0
        %1878 = vmatprep.subr.mxu0 0.0
        %1879 = vmatpush1.xpose.msra.mxu0 0.0
        %1880 = vmatprep.subr.mxu0 0.0
        %1881 = vmatpush1.xpose.msra.mxu0 0.0
        %1882 = vmatprep.subr.mxu0 0.0
        %1883 = vmatpush1.xpose.msra.mxu0 0.0
        %1884 = vmatprep.subr.mxu0 0.0
        %1885 = vmatpush1.xpose.msra.mxu0 0.0
        %1886 = vmatprep.subr.mxu0 0.0
        %1887 = vmatpush1.xpose.msra.mxu0 0.0
        %1888 = vmatprep.subr.mxu0 0.0
        %1889 = vmatpush1.xpose.msra.mxu0 0.0
        %1890 = vmatprep.subr.mxu0 0.0
        %1891 = vmatpush1.xpose.msra.mxu0 0.0
        %1892 = vmatprep.subr.mxu0 0.0
        %1893 = vmatpush1.xpose.msra.mxu0 0.0
        %1894 = vmatprep.subr.mxu0 0.0
        %1895 = vmatpush1.xpose.msra.mxu0 0.0
        %1896 = vmatprep.subr.mxu0 0.0
        %1897 = vmatpush1.xpose.msra.mxu0 0.0
        %1898 = vmatprep.subr.mxu0 0.0
        %1899 = vmatpush1.xpose.msra.mxu0 0.0
        %1900 = vmatprep.subr.mxu0 0.0
        %1901 = vmatpush1.xpose.msra.mxu0 0.0
        %1902 = vmatprep.subr.mxu0 0.0
        %1903 = vmatpush1.xpose.msra.mxu0 0.0
        %1904 = vmatprep.subr.mxu0 0.0
        %1905 = vmatpush1.xpose.msra.mxu0 0.0
        %1906 = vmatprep.subr.mxu0 0.0
        %1907 = vmatpush1.xpose.msra.mxu0 0.0
        %1908 = vmatprep.subr.mxu0 0.0
        %1909 = vmatpush1.xpose.msra.mxu0 0.0
        %1910 = vmatprep.subr.mxu0 0.0
        %1911 = vmatpush1.xpose.msra.mxu0 0.0
        %1912 = vmatprep.subr.mxu0 0.0
        %1913 = vmatpush1.xpose.msra.mxu0 0.0
        %1914 = vmatprep.subr.mxu0 0.0
        %1915 = vmatpush1.xpose.msra.mxu0 0.0
        %1916 = vmatprep.subr.mxu0 0.0
        %1917 = vmatpush1.xpose.msra.mxu0 0.0
        %1918 = vmatprep.subr.mxu0 0.0
        %1919 = vmatpush1.xpose.msra.mxu0 0.0
        %1920 = vmatprep.subr.mxu0 0.0
        %1921 = vmatpush1.xpose.msra.mxu0 0.0
        %1922 = vmatprep.subr.mxu0 0.0
        %1923 = vmatpush1.xpose.msra.mxu0 0.0
        %1924 = vmatprep.subr.mxu0 0.0
        %1925 = vmatpush1.xpose.msra.mxu0 0.0
        %1926 = vmatprep.subr.mxu0 0.0
        %1927 = vmatpush1.xpose.msra.mxu0 0.0
        %1928 = vmatprep.mubr.f32.mxu0 0.0
        %1929 = vmatmul.mubr.f32.gmra.mrb[0].mxu0 %v1856
        %v1930 = vpop.f32.mrb[0].mxu0
        %v1931 = vadd.f32 0.0, %v1930
        %v1932 = vpop.f32.mrb[0].mxu0
        %1933 = vdwg.mxu0
        %v1934 = vadd.f32 %v1848, %v1931
        %v1935 = vld [vmem:[%s6] sm:$0xf]
        %1937 = vset.pattern.permute.xlu0 0
        %1938 = vperm.xlu0 %1937, %v1935
        %v1939 = vpop.permute.xlu0 %1938
        %v1941 = vadd.f32 %v1934, %v1939
        %v1942 = vld [vmem:[%s7] sm:$0xff]
        %v1943 = vld [vmem:[%s7 + $0x8] sm:$0xff]
        %v1944 = vld [vmem:[%s7 + $0x10] sm:$0xff]
        %v1945 = vld [vmem:[%s7 + $0x18] sm:$0xff]
        %vm1946 = vcmask 130048
        %v1948 = vsel %vm1946, %v1941, 0
        %1950 = vmatprep.subr.mxu0 %v1943
        %1951 = vmatpush1.msra.mxu0 %v1942
        %1952 = vmatprep.subr.mxu0 %v1945
        %1953 = vmatpush1.msra.mxu0 %v1944
        %1954 = vmatprep.subr.mxu0 0.0
        %1955 = vmatpush1.msra.mxu0 0.0
        %1956 = vmatprep.subr.mxu0 0.0
        %1957 = vmatpush1.msra.mxu0 0.0
        %1958 = vmatprep.subr.mxu0 0.0
        %1959 = vmatpush1.msra.mxu0 0.0
        %1960 = vmatprep.subr.mxu0 0.0
        %1961 = vmatpush1.msra.mxu0 0.0
        %1962 = vmatprep.subr.mxu0 0.0
        %1963 = vmatpush1.msra.mxu0 0.0
        %1964 = vmatprep.subr.mxu0 0.0
        %1965 = vmatpush1.msra.mxu0 0.0
        %1966 = vmatprep.subr.mxu0 0.0
        %1967 = vmatpush1.msra.mxu0 0.0
        %1968 = vmatprep.subr.mxu0 0.0
        %1969 = vmatpush1.msra.mxu0 0.0
        %1970 = vmatprep.subr.mxu0 0.0
        %1971 = vmatpush1.msra.mxu0 0.0
        %1972 = vmatprep.subr.mxu0 0.0
        %1973 = vmatpush1.msra.mxu0 0.0
        %1974 = vmatprep.subr.mxu0 0.0
        %1975 = vmatpush1.msra.mxu0 0.0
        %1976 = vmatprep.subr.mxu0 0.0
        %1977 = vmatpush1.msra.mxu0 0.0
        %1978 = vmatprep.subr.mxu0 0.0
        %1979 = vmatpush1.msra.mxu0 0.0
        %1980 = vmatprep.subr.mxu0 0.0
        %1981 = vmatpush1.msra.mxu0 0.0
        %1982 = vmatprep.subr.mxu0 0.0
        %1983 = vmatpush1.msra.mxu0 0.0
        %1984 = vmatprep.subr.mxu0 0.0
        %1985 = vmatpush1.msra.mxu0 0.0
        %1986 = vmatprep.subr.mxu0 0.0
        %1987 = vmatpush1.msra.mxu0 0.0
        %1988 = vmatprep.subr.mxu0 0.0
        %1989 = vmatpush1.msra.mxu0 0.0
        %1990 = vmatprep.subr.mxu0 0.0
        %1991 = vmatpush1.msra.mxu0 0.0
        %1992 = vmatprep.subr.mxu0 0.0
        %1993 = vmatpush1.msra.mxu0 0.0
        %1994 = vmatprep.subr.mxu0 0.0
        %1995 = vmatpush1.msra.mxu0 0.0
        %1996 = vmatprep.subr.mxu0 0.0
        %1997 = vmatpush1.msra.mxu0 0.0
        %1998 = vmatprep.subr.mxu0 0.0
        %1999 = vmatpush1.msra.mxu0 0.0
        %2000 = vmatprep.subr.mxu0 0.0
        %2001 = vmatpush1.msra.mxu0 0.0
        %2002 = vmatprep.subr.mxu0 0.0
        %2003 = vmatpush1.msra.mxu0 0.0
        %2004 = vmatprep.subr.mxu0 0.0
        %2005 = vmatpush1.msra.mxu0 0.0
        %2006 = vmatprep.subr.mxu0 0.0
        %2007 = vmatpush1.msra.mxu0 0.0
        %2008 = vmatprep.subr.mxu0 0.0
        %2009 = vmatpush1.msra.mxu0 0.0
        %2010 = vmatprep.subr.mxu0 0.0
        %2011 = vmatpush1.msra.mxu0 0.0
        %2012 = vmatprep.subr.mxu0 0.0
        %2013 = vmatpush1.msra.mxu0 0.0
        %2014 = vmatprep.mubr.f32.mxu0 0.0
        %2015 = vmatmul.mubr.f32.gmra.mrb[0].mxu0 %v1948
        %v2016 = vpop.f32.mrb[0].mxu0
        %v2017 = vadd.f32 0.0, %v2016
        %v2018 = vpop.f32.mrb[0].mxu0
        %v2019 = vadd.f32 0.0, %v2018
        %2020 = vdwg.mxu0
        %v2023 = vcombine.low %v2017, %v2019
        %2025 = vst [vmem:[%s298] sm:$0xff] %v2023
        %s2026 = sand.u32 %s203, 1
        %s2027 = scalar_lea.sflag [#allocation4], %s2026
        %s2028 = sand.u32 %s203, 1
        %s2029 = smul.addr %s2028, 8
        %s2030 = scalar_lea.vmem [#allocation3], %s2029
        // Predicated region
        $region53: #{tpu_custom_call.1} parent=51 // pred_check
          %p2031 = pneg %p213
        $region54: #{tpu_custom_call.1} parent=51 // pred_check_branch
          %2033 = sbr.rel (%p2031) target = $region56
        $region55: #{tpu_custom_call.1} parent=51 // pred_region
          %s2035 = ssub.s32 128, 128
          %2036 = vsyncadd %s2027, %s2035
          %s2037 = smul.addr %s22, 2
          %s2038 = smul.addr %s2037, 64
          %s2039 = scalar_lea.hbm %s8, %s2038
          %s2041 = sshll.u32 %s2030, 4
          %s2042 = int_to_ptr.vmem [resolvable:$true] %s2041
          %2044 = dma.vmem_to_hbm [thread:$0]  %s2042, 128, %s2039, %s2027
        $region56: #{tpu_custom_call.1} parent=51 // pred_fallthru
          _
      $region52: #{tpu_custom_call.1} parent=5 // pred_fallthru
        _
      %p2045 = scmp.le.s32.totalorder 2, %s17
      // Predicated region
      $region57: #{tpu_custom_call.1} parent=5 // pred_check
        %p2046 = pneg %p2045
      $region58: #{tpu_custom_call.1} parent=5 // pred_check_branch
        %2048 = sbr.rel (%p2046) target = $region60
      $region59: #{tpu_custom_call.1} parent=5 // pred_region
        %s2049 = ssub.s32 %s17, 2
        // Predicated region
        $region61: #{tpu_custom_call.1} parent=59 // pred_check
          %p2050 = pneg %p219
        $region62: #{tpu_custom_call.1} parent=59 // pred_check_branch
          %2052 = sbr.rel (%p2050) target = $region64
        $region63: #{tpu_custom_call.1} parent=59 // pred_region
          %s2053 = sand.u32 %s204, 1
          %s2054 = scalar_lea.sflag [#allocation4], %s2053
          %s2055 = sand.u32 %s204, 1
          %s2056 = smul.addr %s2055, 8
          %s2057 = scalar_lea.vmem [#allocation3], %s2056
          %2058 = dma.done %s2054, 128
        $region64: #{tpu_custom_call.1} parent=59 // pred_fallthru
          _
      $region60: #{tpu_custom_call.1} parent=5 // pred_fallthru
        _
    $region6: #{tpu_custom_call.1} parent=1 // loop_footer
      %s21 = sadd.s32 1, %s17
    $region7: #{tpu_custom_call.1} parent=1 // loop_footer_branch
      %16 = sbr.rel target = $region3
    $region8: #{tpu_custom_call.1} parent=1 // loop_exit
      _
    %2059 = vsyncpa [#allocation4], 1
    %s2060 = scalar_lea.sflag [#allocation4], 1
    %2061 = vsyncpa %s2060, 1

</llo_original>
